<compile_context>
chip_gen: v7x
topology: tpu7x:2x2x1
jax: 0.10.0
libtpu: 0.0.40
codegen_flags: <defaults>
</compile_context>

<pallas_src>
import functools

import jax
import jax.numpy as jnp
from jax.experimental import pallas as pl
from jax.experimental.pallas import tpu as pltpu

LANE = 128


def _round_up(x, m):
    return ((x + m - 1) // m) * m


def actor_kernel(x_ref, w1_ref, b1_ref, w2_ref, b2_ref, w3_ref, b3_ref, o_ref):
    # Layer 1: (TB, S)bf16 @ (S, 1024)bf16 -> f32 acc, + f32 bias, tanh (f32).
    x = x_ref[...].astype(jnp.bfloat16)
    a = jnp.tanh(
        jnp.dot(x, w1_ref[...], preferred_element_type=jnp.float32) + b1_ref[...]
    )
    # Layer 2: (TB, 1024)bf16 @ (1024, 512)bf16 -> f32 acc, + bias, tanh.
    a = a.astype(jnp.bfloat16)
    a = jnp.tanh(
        jnp.dot(a, w2_ref[...], preferred_element_type=jnp.float32) + b2_ref[...]
    )
    # Layer 3: (TB, 512)bf16 @ (512, 128)bf16 -> f32 acc, + bias, tanh.
    a = a.astype(jnp.bfloat16)
    o_ref[...] = jnp.tanh(
        jnp.dot(a, w3_ref[...], preferred_element_type=jnp.float32) + b3_ref[...]
    ).astype(o_ref.dtype)


def init_params(key, state_dim, action_dim):
    """Deterministic f32 init mimicking nn.Linear default (U[-1/sqrt(fan_in), +])."""
    dims = [(state_dim, 1024), (1024, 512), (512, action_dim)]
    params = {}
    for i, (fan_in, fan_out) in enumerate(dims, start=1):
        key, kw, kb = jax.random.split(key, 3)
        bound = 1.0 / (fan_in ** 0.5)
        params[f"w{i}"] = jax.random.uniform(
            kw, (fan_in, fan_out), jnp.float32, -bound, bound)
        params[f"b{i}"] = jax.random.uniform(
            kb, (1, fan_out), jnp.float32, -bound, bound)
    return params


def prepare_params(params, action_dim):
    """One-time prep: cast weights to bf16, keep biases f32, lane-pad layer 3."""
    out_pad = _round_up(max(action_dim, LANE), LANE)
    w3 = params["w3"]
    b3 = params["b3"]
    w3p = jnp.zeros((w3.shape[0], out_pad), w3.dtype).at[:, :action_dim].set(w3)
    b3p = jnp.zeros((1, out_pad), b3.dtype).at[:, :action_dim].set(b3)
    return {
        "w1": params["w1"].astype(jnp.bfloat16),
        "b1": params["b1"].astype(jnp.float32),
        "w2": params["w2"].astype(jnp.bfloat16),
        "b2": params["b2"].astype(jnp.float32),
        "w3": w3p.astype(jnp.bfloat16),
        "b3": b3p.astype(jnp.float32),
    }


@functools.partial(jax.jit, static_argnames=("action_dim",))
def actor_forward(state, prep, action_dim):
    """state: (B, state_dim) f32; prep: output of prepare_params."""
    B, state_dim = state.shape
    out_pad = prep["w3"].shape[1]

    # Batch tiling: pad B to a multiple of 8 sublanes; tile at <= 128 rows
    # (matches v5e MXU geometry, fine on v6e/v7x). Weights stay VMEM-resident.
    b_pad = _round_up(max(B, 8), 8)
    tb = min(128, b_pad)
    b_pad = _round_up(b_pad, tb)
    if b_pad != B:
        state = jnp.pad(state, ((0, b_pad - B), (0, 0)))
    num_tiles = b_pad // tb

    # Weight/bias blocks: whole array, constant block index -> resident in VMEM.
    resident = lambda a: pl.BlockSpec(a.shape, lambda i, _a=a: (0,) * _a.ndim)

    out = pl.pallas_call(
        actor_kernel,
        out_shape=jax.ShapeDtypeStruct((b_pad, out_pad), jnp.float32),
        grid=(num_tiles,),
        in_specs=[
            pl.BlockSpec((tb, state_dim), lambda i: (i, 0)),   # state tile
            resident(prep["w1"]), resident(prep["b1"]),
            resident(prep["w2"]), resident(prep["b2"]),
            resident(prep["w3"]), resident(prep["b3"]),
        ],
        out_specs=pl.BlockSpec((tb, out_pad), lambda i: (i, 0)),
        compiler_params=pltpu.CompilerParams(
            dimension_semantics=("parallel",),   # shards tiles across v7x TCs
            vmem_limit_bytes=16 << 20,
        ),
    )(state, prep["w1"], prep["b1"], prep["w2"], prep["b2"],
      prep["w3"], prep["b3"])

    return out[:B, :action_dim]


def reference_forward(state, prep, action_dim):
    """Pure-JAX reference following the same bf16-weight / f32-accum path."""
    x = state.astype(jnp.bfloat16)
    a = jnp.tanh(
        jnp.dot(x, prep["w1"], preferred_element_type=jnp.float32) + prep["b1"])
    a = a.astype(jnp.bfloat16)
    a = jnp.tanh(
        jnp.dot(a, prep["w2"], preferred_element_type=jnp.float32) + prep["b2"])
    a = a.astype(jnp.bfloat16)
    out = jnp.tanh(
        jnp.dot(a, prep["w3"], preferred_element_type=jnp.float32) + prep["b3"])
    return out[:, :action_dim]


if __name__ == "__main__":
    key = jax.random.PRNGKey(0)
    state_dim, action_dim, batch = 32, 8, 8

    k_params, k_state = jax.random.split(key)
    params = init_params(k_params, state_dim, action_dim)
    prep = prepare_params(params, action_dim)
    state = jax.random.normal(k_state, (batch, state_dim), jnp.float32)

    out = actor_forward(state, prep, action_dim=action_dim)
    out = jax.block_until_ready(out)

    ref = reference_forward(state, prep, action_dim)
    assert out.shape == (batch, action_dim), out.shape
    assert jnp.allclose(out, ref, atol=5e-3, rtol=0), "mismatch vs reference"

    print("KERNEL_OK")
</pallas_src>

<mosaic_0001>
module attributes {stable_mosaic.version = 11 : i64} {
  func.func @actor_kernel(%arg0: i32, %arg1: memref<8x32xf32, #tpu.memory_space<vmem>>, %arg2: memref<32x1024xbf16, #tpu.memory_space<vmem>>, %arg3: memref<1x1024xf32, #tpu.memory_space<vmem>>, %arg4: memref<1024x512xbf16, #tpu.memory_space<vmem>>, %arg5: memref<1x512xf32, #tpu.memory_space<vmem>>, %arg6: memref<512x128xbf16, #tpu.memory_space<vmem>>, %arg7: memref<1x128xf32, #tpu.memory_space<vmem>>, %arg8: memref<8x128xf32, #tpu.memory_space<vmem>>) attributes {dimension_semantics = [#tpu.dimension_semantics<parallel>], iteration_bounds = array<i64: 1>, scalar_prefetch = 0 : i64, scratch_operands = 0 : i64, tpu.core_type = #tpu.core_type<tc>, window_params = [{transform_indices = @transform_0, window_bounds = array<i64: 8, 32>}, {pipeline_mode = #tpu.pipeline_mode<synchronous>, transform_indices = @transform_1, window_bounds = array<i64: 32, 1024>}, {pipeline_mode = #tpu.pipeline_mode<synchronous>, transform_indices = @transform_2, window_bounds = array<i64: 1, 1024>}, {pipeline_mode = #tpu.pipeline_mode<synchronous>, transform_indices = @transform_3, window_bounds = array<i64: 1024, 512>}, {pipeline_mode = #tpu.pipeline_mode<synchronous>, transform_indices = @transform_4, window_bounds = array<i64: 1, 512>}, {pipeline_mode = #tpu.pipeline_mode<synchronous>, transform_indices = @transform_5, window_bounds = array<i64: 512, 128>}, {pipeline_mode = #tpu.pipeline_mode<synchronous>, transform_indices = @transform_6, window_bounds = array<i64: 1, 128>}, {transform_indices = @transform_7, window_bounds = array<i64: 8, 128>}]} {
    %c0 = arith.constant 0 : index
    %c0_0 = arith.constant 0 : index
    %0 = vector.load %arg1[%c0, %c0_0] : memref<8x32xf32, #tpu.memory_space<vmem>>, vector<8x32xf32>
    %1 = arith.truncf %0 : vector<8x32xf32> to vector<8x32xbf16>
    %c0_1 = arith.constant 0 : index
    %c0_2 = arith.constant 0 : index
    %2 = vector.load %arg2[%c0_1, %c0_2] : memref<32x1024xbf16, #tpu.memory_space<vmem>>, vector<32x1024xbf16>
    %cst = arith.constant dense<0.000000e+00> : vector<8x1024xf32>
    %3 = tpu.matmul %1, %2, %cst {dimension_numbers = #tpu.dot_dimension_numbers<[1], [0], [0], [1], [0, 0, 1, 1], [], []>} : vector<8x32xbf16>, vector<32x1024xbf16>, vector<8x1024xf32> -> vector<8x1024xf32>
    %c0_3 = arith.constant 0 : index
    %c0_4 = arith.constant 0 : index
    %4 = vector.load %arg3[%c0_3, %c0_4] : memref<1x1024xf32, #tpu.memory_space<vmem>>, vector<1x1024xf32>
    %5 = vector.broadcast %4 : vector<1x1024xf32> to vector<8x1024xf32>
    %6 = arith.addf %3, %5 : vector<8x1024xf32>
    %7 = math.tanh %6 : vector<8x1024xf32>
    %8 = arith.truncf %7 : vector<8x1024xf32> to vector<8x1024xbf16>
    %c0_5 = arith.constant 0 : index
    %c0_6 = arith.constant 0 : index
    %9 = vector.load %arg4[%c0_5, %c0_6] : memref<1024x512xbf16, #tpu.memory_space<vmem>>, vector<1024x512xbf16>
    %cst_7 = arith.constant dense<0.000000e+00> : vector<8x512xf32>
    %10 = tpu.matmul %8, %9, %cst_7 {dimension_numbers = #tpu.dot_dimension_numbers<[1], [0], [0], [1], [0, 0, 1, 1], [], []>} : vector<8x1024xbf16>, vector<1024x512xbf16>, vector<8x512xf32> -> vector<8x512xf32>
    %c0_8 = arith.constant 0 : index
    %c0_9 = arith.constant 0 : index
    %11 = vector.load %arg5[%c0_8, %c0_9] : memref<1x512xf32, #tpu.memory_space<vmem>>, vector<1x512xf32>
    %12 = vector.broadcast %11 : vector<1x512xf32> to vector<8x512xf32>
    %13 = arith.addf %10, %12 : vector<8x512xf32>
    %14 = math.tanh %13 : vector<8x512xf32>
    %15 = arith.truncf %14 : vector<8x512xf32> to vector<8x512xbf16>
    %c0_10 = arith.constant 0 : index
    %c0_11 = arith.constant 0 : index
    %16 = vector.load %arg6[%c0_10, %c0_11] : memref<512x128xbf16, #tpu.memory_space<vmem>>, vector<512x128xbf16>
    %cst_12 = arith.constant dense<0.000000e+00> : vector<8x128xf32>
    %17 = tpu.matmul %15, %16, %cst_12 {dimension_numbers = #tpu.dot_dimension_numbers<[1], [0], [0], [1], [0, 0, 1, 1], [], []>} : vector<8x512xbf16>, vector<512x128xbf16>, vector<8x128xf32> -> vector<8x128xf32>
    %c0_13 = arith.constant 0 : index
    %c0_14 = arith.constant 0 : index
    %18 = vector.load %arg7[%c0_13, %c0_14] : memref<1x128xf32, #tpu.memory_space<vmem>>, vector<1x128xf32>
    %19 = vector.broadcast %18 : vector<1x128xf32> to vector<8x128xf32>
    %20 = arith.addf %17, %19 : vector<8x128xf32>
    %21 = math.tanh %20 : vector<8x128xf32>
    %c0_15 = arith.constant 0 : index
    %c0_16 = arith.constant 0 : index
    %22 = vector.load %arg8[%c0_15, %c0_16] : memref<8x128xf32, #tpu.memory_space<vmem>>, vector<8x128xf32>
    tpu.vector_store %arg8[%c0_15, %c0_16], %21 {strides = array<i32>} : memref<8x128xf32, #tpu.memory_space<vmem>>, vector<8x128xf32>,
    return
  }
  func.func @transform_0(%arg0: i32) -> (i32, i32) {
    %c0_i32 = arith.constant 0 : i32
    %c0_i32_0 = arith.constant 0 : i32
    return %arg0, %c0_i32 : i32, i32
  }
  func.func @transform_1(%arg0: i32) -> (i32, i32) {
    %c0_i32 = arith.constant 0 : i32
    %c0_i32_0 = arith.constant 0 : i32
    %c0_i32_1 = arith.constant 0 : i32
    return %c0_i32, %c0_i32_0 : i32, i32
  }
  func.func @transform_2(%arg0: i32) -> (i32, i32) {
    %c0_i32 = arith.constant 0 : i32
    %c0_i32_0 = arith.constant 0 : i32
    %c0_i32_1 = arith.constant 0 : i32
    return %c0_i32, %c0_i32_0 : i32, i32
  }
  func.func @transform_3(%arg0: i32) -> (i32, i32) {
    %c0_i32 = arith.constant 0 : i32
    %c0_i32_0 = arith.constant 0 : i32
    %c0_i32_1 = arith.constant 0 : i32
    return %c0_i32, %c0_i32_0 : i32, i32
  }
  func.func @transform_4(%arg0: i32) -> (i32, i32) {
    %c0_i32 = arith.constant 0 : i32
    %c0_i32_0 = arith.constant 0 : i32
    %c0_i32_1 = arith.constant 0 : i32
    return %c0_i32, %c0_i32_0 : i32, i32
  }
  func.func @transform_5(%arg0: i32) -> (i32, i32) {
    %c0_i32 = arith.constant 0 : i32
    %c0_i32_0 = arith.constant 0 : i32
    %c0_i32_1 = arith.constant 0 : i32
    return %c0_i32, %c0_i32_0 : i32, i32
  }
  func.func @transform_6(%arg0: i32) -> (i32, i32) {
    %c0_i32 = arith.constant 0 : i32
    %c0_i32_0 = arith.constant 0 : i32
    %c0_i32_1 = arith.constant 0 : i32
    return %c0_i32, %c0_i32_0 : i32, i32
  }
  func.func @transform_7(%arg0: i32) -> (i32, i32) {
    %c0_i32 = arith.constant 0 : i32
    %c0_i32_0 = arith.constant 0 : i32
    return %arg0, %c0_i32 : i32, i32
  }
}

</mosaic_0001>

<llo_original>
// kernel: actor_forward.1
$region0: #{actor_forward.1}
  #allocation0 [shape = 'u32[]', space=smem, size = 0x4, offset = 0x4, fixed_abs, tag = 'smem constant byte address 0x4 - core index']
  #allocation1 [shape = 'u32[144,128]{1,0:T(1,128)}', space=vmem, size = 0x12000, scoped, tag = 'internal scratch']
  %s0 = inlined_call_operand.hbm [shape: f32[8,32], index: 0, kind: input, shape index: {}]
  %s1 = inlined_call_operand.hbm [shape: bf16[32,1024], index: 1, kind: input, shape index: {}]
  %s2 = inlined_call_operand.hbm [shape: f32[1,1024], index: 2, kind: input, shape index: {}]
  %s3 = inlined_call_operand.hbm [shape: bf16[1024,512], index: 3, kind: input, shape index: {}]
  %s4 = inlined_call_operand.vmem [shape: f32[1,512], index: 4, kind: input, shape index: {}]
  %s5 = inlined_call_operand.hbm [shape: bf16[512,128], index: 5, kind: input, shape index: {}]
  %s6 = inlined_call_operand.vmem [shape: f32[1,128], index: 6, kind: input, shape index: {}]
  %s7 = inlined_call_operand.hbm [shape: f32[8,128], index: 7, kind: output, shape index: {}]
  %s8 = sld [smem:[#allocation0]]
  $region58: #{actor_forward.1} parent=0
    _
  %s10 = ssub.s32 1, %s8
  %s11 = scalar_select 0, %s10, %s8
  $region1: #{actor_forward.1} parent=0
    #allocation2 [shape = 'u8[4096]{0}', space=vmem, size = 0x1000, scoped, tag = 'input window, operand 0, single buffered']
    #allocation3 [shape = 's32[1]{0}', space=sflag, size = 0x4, scoped, tag = 'scoped memory for actor_forward.1']
    #allocation4 [shape = 's32[1]{0}', space=sflag, size = 0x4, scoped, tag = 'scoped memory for actor_forward.1']
    #allocation5 [shape = 'u8[65536]{0}', space=vmem, size = 0x10000, scoped, tag = 'input window, operand 1, single buffered']
    #allocation6 [shape = 's32[1]{0}', space=sflag, size = 0x4, scoped, tag = 'scoped memory for actor_forward.1']
    #allocation7 [shape = 'u8[4096]{0}', space=vmem, size = 0x1000, scoped, tag = 'input window, operand 2, single buffered']
    #allocation8 [shape = 'u8[1048576]{0}', space=vmem, size = 0x100000, scoped, tag = 'input window, operand 3, single buffered']
    #allocation9 [shape = 's32[1]{0}', space=sflag, size = 0x4, scoped, tag = 'scoped memory for actor_forward.1']
    #allocation10 [shape = 'u8[131072]{0}', space=vmem, size = 0x20000, scoped, tag = 'input window, operand 5, single buffered']
    #allocation11 [shape = 'u8[4096]{0}', space=vmem, size = 0x1000, scoped, tag = 'output window, operand 0, single buffered']
    %12 = vsyncpa [#allocation3], 0
    %13 = vsyncpa [#allocation6], 0
    %14 = vsyncpa [#allocation9], 0
    %15 = vsyncpa [#allocation4], 0
    // Predicated region
    $region2: #{actor_forward.1} parent=1 // pred_check
      _
    $region3: #{actor_forward.1} parent=1 // pred_check_branch
      %17 = sbr.rel (0) target = $region5
    $region4: #{actor_forward.1} parent=1 // pred_region
      %s19 = ssub.s32 128, 128
      %20 = vsyncadd [#allocation3], %s19
      %s22 = sshll.u32 [#allocation2], 4
      %s23 = int_to_ptr.vmem [resolvable:$true] %s22
      %25 = dma.hbm_to_vmem [thread:$0]  %s0, 128, %s23, [#allocation3]
    $region5: #{actor_forward.1} parent=1 // pred_fallthru
      _
    // Predicated region
    $region6: #{actor_forward.1} parent=1 // pred_check
      _
    $region7: #{actor_forward.1} parent=1 // pred_check_branch
      %27 = sbr.rel (0) target = $region9
    $region8: #{actor_forward.1} parent=1 // pred_region
      %s29 = ssub.s32 2048, 2048
      %30 = vsyncadd [#allocation6], %s29
      %s31 = sshll.u32 [#allocation5], 4
      %s32 = int_to_ptr.vmem [resolvable:$true] %s31
      %37 = dma.hbm_to_vmem [thread:$0]  %s1, 2048, %s32, [#allocation6], 512, 512, 32
    $region9: #{actor_forward.1} parent=1 // pred_fallthru
      _
    // Predicated region
    $region10: #{actor_forward.1} parent=1 // pred_check
      _
    $region11: #{actor_forward.1} parent=1 // pred_check_branch
      %39 = sbr.rel (0) target = $region13
    $region12: #{actor_forward.1} parent=1 // pred_region
      %s41 = ssub.s32 128, 128
      %42 = vsyncadd [#allocation6], %s41
      %s44 = sshll.u32 [#allocation7], 4
      %s45 = int_to_ptr.vmem [resolvable:$true] %s44
      %47 = dma.hbm_to_vmem [thread:$0]  %s2, 128, %s45, [#allocation6]
    $region13: #{actor_forward.1} parent=1 // pred_fallthru
      _
    // Predicated region
    $region14: #{actor_forward.1} parent=1 // pred_check
      _
    $region15: #{actor_forward.1} parent=1 // pred_check_branch
      %49 = sbr.rel (0) target = $region17
    $region16: #{actor_forward.1} parent=1 // pred_region
      %s51 = ssub.s32 32768, 32768
      %52 = vsyncadd [#allocation9], %s51
      %s53 = sshll.u32 [#allocation8], 4
      %s54 = int_to_ptr.vmem [resolvable:$true] %s53
      %59 = dma.hbm_to_vmem [thread:$0]  %s3, 32768, %s54, [#allocation9], 256, 256, 16
    $region17: #{actor_forward.1} parent=1 // pred_fallthru
      _
    // Predicated region
    $region18: #{actor_forward.1} parent=1 // pred_check
      _
    $region19: #{actor_forward.1} parent=1 // pred_check_branch
      %61 = sbr.rel (0) target = $region21
    $region20: #{actor_forward.1} parent=1 // pred_region
      _
    $region21: #{actor_forward.1} parent=1 // pred_fallthru
      _
    // Predicated region
    $region22: #{actor_forward.1} parent=1 // pred_check
      _
    $region23: #{actor_forward.1} parent=1 // pred_check_branch
      %63 = sbr.rel (0) target = $region25
    $region24: #{actor_forward.1} parent=1 // pred_region
      %s65 = ssub.s32 4096, 4096
      %66 = vsyncadd [#allocation9], %s65
      %s67 = sshll.u32 [#allocation10], 4
      %s68 = int_to_ptr.vmem [resolvable:$true] %s67
      %73 = dma.hbm_to_vmem [thread:$0]  %s5, 4096, %s68, [#allocation9], 64, 64, 4
    $region25: #{actor_forward.1} parent=1 // pred_fallthru
      _
    // Predicated region
    $region26: #{actor_forward.1} parent=1 // pred_check
      _
    $region27: #{actor_forward.1} parent=1 // pred_check_branch
      %75 = sbr.rel (0) target = $region29
    $region28: #{actor_forward.1} parent=1 // pred_region
      _
    $region29: #{actor_forward.1} parent=1 // pred_fallthru
      _
    // Predicated region
    $region30: #{actor_forward.1} parent=1 // pred_check
      _
    $region31: #{actor_forward.1} parent=1 // pred_check_branch
      %77 = sbr.rel (0) target = $region33
    $region32: #{actor_forward.1} parent=1 // pred_region
      %78 = dma.done [#allocation3], 128
    $region33: #{actor_forward.1} parent=1 // pred_fallthru
      _
    // Predicated region
    $region34: #{actor_forward.1} parent=1 // pred_check
      _
    $region35: #{actor_forward.1} parent=1 // pred_check_branch
      %80 = sbr.rel (0) target = $region37
    $region36: #{actor_forward.1} parent=1 // pred_region
      %81 = dma.done [#allocation6], 2048
    $region37: #{actor_forward.1} parent=1 // pred_fallthru
      _
    // Predicated region
    $region38: #{actor_forward.1} parent=1 // pred_check
      _
    $region39: #{actor_forward.1} parent=1 // pred_check_branch
      %83 = sbr.rel (0) target = $region41
    $region40: #{actor_forward.1} parent=1 // pred_region
      %84 = dma.done [#allocation6], 128
    $region41: #{actor_forward.1} parent=1 // pred_fallthru
      _
    // Predicated region
    $region42: #{actor_forward.1} parent=1 // pred_check
      _
    $region43: #{actor_forward.1} parent=1 // pred_check_branch
      %86 = sbr.rel (0) target = $region45
    $region44: #{actor_forward.1} parent=1 // pred_region
      %87 = dma.done [#allocation9], 32768
    $region45: #{actor_forward.1} parent=1 // pred_fallthru
      _
    // Predicated region
    $region46: #{actor_forward.1} parent=1 // pred_check
      _
    $region47: #{actor_forward.1} parent=1 // pred_check_branch
      %89 = sbr.rel (0) target = $region49
    $region48: #{actor_forward.1} parent=1 // pred_region
      %90 = dma.done [#allocation9], 4096
    $region49: #{actor_forward.1} parent=1 // pred_fallthru
      _
    %v92 = vld [vmem:[#allocation2] sm:$0xff]
    %v93 = vpack.c.bf16 %v92, %v92
    %v94 = vld [vmem:[#allocation5] sm:$0xff]
    %v95 = vld [vmem:[#allocation5 + $0x8] sm:$0xff]
    %v96 = vld [vmem:[#allocation5 + $0x10] sm:$0xff]
    %v97 = vld [vmem:[#allocation5 + $0x18] sm:$0xff]
    %v98 = vld [vmem:[#allocation5 + $0x20] sm:$0xff]
    %v99 = vld [vmem:[#allocation5 + $0x28] sm:$0xff]
    %v100 = vld [vmem:[#allocation5 + $0x30] sm:$0xff]
    %v101 = vld [vmem:[#allocation5 + $0x38] sm:$0xff]
    %v102 = vld [vmem:[#allocation5 + $0x40] sm:$0xff]
    %v103 = vld [vmem:[#allocation5 + $0x48] sm:$0xff]
    %v104 = vld [vmem:[#allocation5 + $0x50] sm:$0xff]
    %v105 = vld [vmem:[#allocation5 + $0x58] sm:$0xff]
    %v106 = vld [vmem:[#allocation5 + $0x60] sm:$0xff]
    %v107 = vld [vmem:[#allocation5 + $0x68] sm:$0xff]
    %v108 = vld [vmem:[#allocation5 + $0x70] sm:$0xff]
    %v109 = vld [vmem:[#allocation5 + $0x78] sm:$0xff]
    %v110 = vld [vmem:[#allocation7] sm:$0xff]
    %v112 = vlaneseq
    %v113 = vshrl.u32 %v112, 7
    %v114 = vsub.s32 0, %v113
    %v115 = vrot.slane %v110, %v114
    %v116 = vlaneseq
    %v117 = vshrl.u32 %v116, 7
    %v118 = vsub.s32 1, %v117
    %v119 = vrot.slane %v110, %v118
    %v120 = vlaneseq
    %v121 = vshrl.u32 %v120, 7
    %v122 = vsub.s32 2, %v121
    %v123 = vrot.slane %v110, %v122
    %v124 = vlaneseq
    %v125 = vshrl.u32 %v124, 7
    %v126 = vsub.s32 3, %v125
    %v127 = vrot.slane %v110, %v126
    %v128 = vlaneseq
    %v129 = vshrl.u32 %v128, 7
    %v130 = vsub.s32 4, %v129
    %v131 = vrot.slane %v110, %v130
    %v132 = vlaneseq
    %v133 = vshrl.u32 %v132, 7
    %v134 = vsub.s32 5, %v133
    %v135 = vrot.slane %v110, %v134
    %v136 = vlaneseq
    %v137 = vshrl.u32 %v136, 7
    %v138 = vsub.s32 6, %v137
    %v139 = vrot.slane %v110, %v138
    %v140 = vlaneseq
    %v141 = vshrl.u32 %v140, 7
    %v142 = vsub.s32 7, %v141
    %v143 = vrot.slane %v110, %v142
    %v168 = vunpack.c.l.b16 %v94
    %v169 = vunpack.c.h.b16 %v94
    %v170 = vunpack.c.l.b16 %v95
    %v171 = vunpack.c.h.b16 %v95
    %v172 = vunpack.c.l.b16 %v96
    %v173 = vunpack.c.h.b16 %v96
    %v174 = vunpack.c.l.b16 %v97
    %v175 = vunpack.c.h.b16 %v97
    %v176 = vunpack.c.l.b16 %v98
    %v177 = vunpack.c.h.b16 %v98
    %v178 = vunpack.c.l.b16 %v99
    %v179 = vunpack.c.h.b16 %v99
    %v180 = vunpack.c.l.b16 %v100
    %v181 = vunpack.c.h.b16 %v100
    %v182 = vunpack.c.l.b16 %v101
    %v183 = vunpack.c.h.b16 %v101
    %v184 = vunpack.c.l.b16 %v102
    %v185 = vunpack.c.h.b16 %v102
    %v186 = vunpack.c.l.b16 %v103
    %v187 = vunpack.c.h.b16 %v103
    %v188 = vunpack.c.l.b16 %v104
    %v189 = vunpack.c.h.b16 %v104
    %v190 = vunpack.c.l.b16 %v105
    %v191 = vunpack.c.h.b16 %v105
    %v192 = vunpack.c.l.b16 %v106
    %v193 = vunpack.c.h.b16 %v106
    %v194 = vunpack.c.l.b16 %v107
    %v195 = vunpack.c.h.b16 %v107
    %v196 = vunpack.c.l.b16 %v108
    %v197 = vunpack.c.h.b16 %v108
    %v198 = vunpack.c.l.b16 %v109
    %v199 = vunpack.c.h.b16 %v109
    %v200 = vpack.c.b16 %v176, %v168
    %v201 = vpack.c.b16 %v177, %v169
    %v202 = vpack.c.b16 %v178, %v170
    %v203 = vpack.c.b16 %v179, %v171
    %v204 = vpack.c.b16 %v180, %v172
    %v205 = vpack.c.b16 %v181, %v173
    %v206 = vpack.c.b16 %v182, %v174
    %v207 = vpack.c.b16 %v183, %v175
    %v208 = vpack.c.b16 %v192, %v184
    %v209 = vpack.c.b16 %v193, %v185
    %v210 = vpack.c.b16 %v194, %v186
    %v211 = vpack.c.b16 %v195, %v187
    %v212 = vpack.c.b16 %v196, %v188
    %v213 = vpack.c.b16 %v197, %v189
    %v214 = vpack.c.b16 %v198, %v190
    %v215 = vpack.c.b16 %v199, %v191
    %vm232 = vcmask 261120
    %v234 = vsel %vm232, %v93, 0
    %236 = vmatprep.subr.bf16.mxu0 %v201
    %237 = vmatpush1.bf16.msra.mxu0 %v200
    %238 = vmatprep.subr.bf16.mxu0 %v209
    %239 = vmatpush1.bf16.msra.mxu0 %v208
    %240 = vmatprep.subr.bf16.mxu0 0
    %241 = vmatpush1.bf16.msra.mxu0 0
    %242 = vmatprep.subr.bf16.mxu0 0
    %243 = vmatpush1.bf16.msra.mxu0 0
    %244 = vmatprep.subr.bf16.mxu0 0
    %245 = vmatpush1.bf16.msra.mxu0 0
    %246 = vmatprep.subr.bf16.mxu0 0
    %247 = vmatpush1.bf16.msra.mxu0 0
    %248 = vmatprep.subr.bf16.mxu0 0
    %249 = vmatpush1.bf16.msra.mxu0 0
    %250 = vmatprep.subr.bf16.mxu0 0
    %251 = vmatpush1.bf16.msra.mxu0 0
    %252 = vmatprep.subr.bf16.mxu0 0
    %253 = vmatpush1.bf16.msra.mxu0 0
    %254 = vmatprep.subr.bf16.mxu0 0
    %255 = vmatpush1.bf16.msra.mxu0 0
    %256 = vmatprep.subr.bf16.mxu0 0
    %257 = vmatpush1.bf16.msra.mxu0 0
    %258 = vmatprep.subr.bf16.mxu0 0
    %259 = vmatpush1.bf16.msra.mxu0 0
    %260 = vmatprep.subr.bf16.mxu0 0
    %261 = vmatpush1.bf16.msra.mxu0 0
    %262 = vmatprep.subr.bf16.mxu0 0
    %263 = vmatpush1.bf16.msra.mxu0 0
    %264 = vmatprep.subr.bf16.mxu0 0
    %265 = vmatpush1.bf16.msra.mxu0 0
    %266 = vmatprep.subr.bf16.mxu0 0
    %267 = vmatpush1.bf16.msra.mxu0 0
    %268 = vmatprep.mubr.bf16.mxu0 0
    %269 = vmatmul.mubr.bf16.gmra.mrb[0].mxu0 %v234
    %v270 = vpop.f32.mrb[0].mxu0
    %v271 = vadd.f32 %v115, %v270
    %v272 = vpop.f32.mrb[0].mxu0
    %v273 = vadd.f32 %v119, %v272
    %v274 = vpop.f32.mrb[0].mxu0
    %v275 = vpop.f32.mrb[0].mxu0
    %276 = vdwg.mxu0
    %277 = vmatprep.subr.bf16.mxu0 %v203
    %278 = vmatpush1.bf16.msra.mxu0 %v202
    %279 = vmatprep.subr.bf16.mxu0 %v211
    %280 = vmatpush1.bf16.msra.mxu0 %v210
    %281 = vmatprep.subr.bf16.mxu0 0
    %282 = vmatpush1.bf16.msra.mxu0 0
    %283 = vmatprep.subr.bf16.mxu0 0
    %284 = vmatpush1.bf16.msra.mxu0 0
    %285 = vmatprep.subr.bf16.mxu0 0
    %286 = vmatpush1.bf16.msra.mxu0 0
    %287 = vmatprep.subr.bf16.mxu0 0
    %288 = vmatpush1.bf16.msra.mxu0 0
    %289 = vmatprep.subr.bf16.mxu0 0
    %290 = vmatpush1.bf16.msra.mxu0 0
    %291 = vmatprep.subr.bf16.mxu0 0
    %292 = vmatpush1.bf16.msra.mxu0 0
    %293 = vmatprep.subr.bf16.mxu0 0
    %294 = vmatpush1.bf16.msra.mxu0 0
    %295 = vmatprep.subr.bf16.mxu0 0
    %296 = vmatpush1.bf16.msra.mxu0 0
    %297 = vmatprep.subr.bf16.mxu0 0
    %298 = vmatpush1.bf16.msra.mxu0 0
    %299 = vmatprep.subr.bf16.mxu0 0
    %300 = vmatpush1.bf16.msra.mxu0 0
    %301 = vmatprep.subr.bf16.mxu0 0
    %302 = vmatpush1.bf16.msra.mxu0 0
    %303 = vmatprep.subr.bf16.mxu0 0
    %304 = vmatpush1.bf16.msra.mxu0 0
    %305 = vmatprep.subr.bf16.mxu0 0
    %306 = vmatpush1.bf16.msra.mxu0 0
    %307 = vmatprep.subr.bf16.mxu0 0
    %308 = vmatpush1.bf16.msra.mxu0 0
    %309 = vmatprep.mubr.bf16.mxu0 0
    %310 = vmatmul.mubr.bf16.gmra.mrb[0].mxu0 %v234
    %v311 = vpop.f32.mrb[0].mxu0
    %v312 = vadd.f32 %v123, %v311
    %v313 = vpop.f32.mrb[0].mxu0
    %v314 = vadd.f32 %v127, %v313
    %v315 = vpop.f32.mrb[0].mxu0
    %v316 = vpop.f32.mrb[0].mxu0
    %317 = vdwg.mxu0
    %318 = vmatprep.subr.bf16.mxu0 %v205
    %319 = vmatpush1.bf16.msra.mxu0 %v204
    %320 = vmatprep.subr.bf16.mxu0 %v213
    %321 = vmatpush1.bf16.msra.mxu0 %v212
    %322 = vmatprep.subr.bf16.mxu0 0
    %323 = vmatpush1.bf16.msra.mxu0 0
    %324 = vmatprep.subr.bf16.mxu0 0
    %325 = vmatpush1.bf16.msra.mxu0 0
    %326 = vmatprep.subr.bf16.mxu0 0
    %327 = vmatpush1.bf16.msra.mxu0 0
    %328 = vmatprep.subr.bf16.mxu0 0
    %329 = vmatpush1.bf16.msra.mxu0 0
    %330 = vmatprep.subr.bf16.mxu0 0
    %331 = vmatpush1.bf16.msra.mxu0 0
    %332 = vmatprep.subr.bf16.mxu0 0
    %333 = vmatpush1.bf16.msra.mxu0 0
    %334 = vmatprep.subr.bf16.mxu0 0
    %335 = vmatpush1.bf16.msra.mxu0 0
    %336 = vmatprep.subr.bf16.mxu0 0
    %337 = vmatpush1.bf16.msra.mxu0 0
    %338 = vmatprep.subr.bf16.mxu0 0
    %339 = vmatpush1.bf16.msra.mxu0 0
    %340 = vmatprep.subr.bf16.mxu0 0
    %341 = vmatpush1.bf16.msra.mxu0 0
    %342 = vmatprep.subr.bf16.mxu0 0
    %343 = vmatpush1.bf16.msra.mxu0 0
    %344 = vmatprep.subr.bf16.mxu0 0
    %345 = vmatpush1.bf16.msra.mxu0 0
    %346 = vmatprep.subr.bf16.mxu0 0
    %347 = vmatpush1.bf16.msra.mxu0 0
    %348 = vmatprep.subr.bf16.mxu0 0
    %349 = vmatpush1.bf16.msra.mxu0 0
    %350 = vmatprep.mubr.bf16.mxu0 0
    %351 = vmatmul.mubr.bf16.gmra.mrb[0].mxu0 %v234
    %v352 = vpop.f32.mrb[0].mxu0
    %v353 = vadd.f32 %v131, %v352
    %v354 = vpop.f32.mrb[0].mxu0
    %v355 = vadd.f32 %v135, %v354
    %v356 = vpop.f32.mrb[0].mxu0
    %v357 = vpop.f32.mrb[0].mxu0
    %358 = vdwg.mxu0
    %359 = vmatprep.subr.bf16.mxu0 %v207
    %360 = vmatpush1.bf16.msra.mxu0 %v206
    %361 = vmatprep.subr.bf16.mxu0 %v215
    %362 = vmatpush1.bf16.msra.mxu0 %v214
    %363 = vmatprep.subr.bf16.mxu0 0
    %364 = vmatpush1.bf16.msra.mxu0 0
    %365 = vmatprep.subr.bf16.mxu0 0
    %366 = vmatpush1.bf16.msra.mxu0 0
    %367 = vmatprep.subr.bf16.mxu0 0
    %368 = vmatpush1.bf16.msra.mxu0 0
    %369 = vmatprep.subr.bf16.mxu0 0
    %370 = vmatpush1.bf16.msra.mxu0 0
    %371 = vmatprep.subr.bf16.mxu0 0
    %372 = vmatpush1.bf16.msra.mxu0 0
    %373 = vmatprep.subr.bf16.mxu0 0
    %374 = vmatpush1.bf16.msra.mxu0 0
    %375 = vmatprep.subr.bf16.mxu0 0
    %376 = vmatpush1.bf16.msra.mxu0 0
    %377 = vmatprep.subr.bf16.mxu0 0
    %378 = vmatpush1.bf16.msra.mxu0 0
    %379 = vmatprep.subr.bf16.mxu0 0
    %380 = vmatpush1.bf16.msra.mxu0 0
    %381 = vmatprep.subr.bf16.mxu0 0
    %382 = vmatpush1.bf16.msra.mxu0 0
    %383 = vmatprep.subr.bf16.mxu0 0
    %384 = vmatpush1.bf16.msra.mxu0 0
    %385 = vmatprep.subr.bf16.mxu0 0
    %386 = vmatpush1.bf16.msra.mxu0 0
    %387 = vmatprep.subr.bf16.mxu0 0
    %388 = vmatpush1.bf16.msra.mxu0 0
    %389 = vmatprep.subr.bf16.mxu0 0
    %390 = vmatpush1.bf16.msra.mxu0 0
    %391 = vmatprep.mubr.bf16.mxu0 0
    %392 = vmatmul.mubr.bf16.gmra.mrb[0].mxu0 %v234
    %v393 = vpop.f32.mrb[0].mxu0
    %v394 = vadd.f32 %v139, %v393
    %v395 = vpop.f32.mrb[0].mxu0
    %v396 = vadd.f32 %v143, %v395
    %v397 = vpop.f32.mrb[0].mxu0
    %v398 = vpop.f32.mrb[0].mxu0
    %399 = vdwg.mxu0
    %v400 = vtanh.pop %v271
    %v401 = vtanh.pop %v273
    %v402 = vtanh.pop %v312
    %v403 = vtanh.pop %v314
    %v404 = vtanh.pop %v353
    %v405 = vtanh.pop %v355
    %v406 = vtanh.pop %v394
    %v407 = vtanh.pop %v396
    %v408 = vpack.c.bf16 %v400, %v400
    %v409 = vpack.c.bf16 %v401, %v401
    %v410 = vpack.c.bf16 %v402, %v402
    %v411 = vpack.c.bf16 %v403, %v403
    %v412 = vpack.c.bf16 %v404, %v404
    %v413 = vpack.c.bf16 %v405, %v405
    %v414 = vpack.c.bf16 %v406, %v406
    %v415 = vpack.c.bf16 %v407, %v407
    %v416 = vld [vmem:[#allocation8] sm:$0xff]
    %v417 = vld [vmem:[#allocation8 + $0x8] sm:$0xff]
    %v418 = vld [vmem:[#allocation8 + $0x10] sm:$0xff]
    %v419 = vld [vmem:[#allocation8 + $0x18] sm:$0xff]
    %v420 = vld [vmem:[#allocation8 + $0x20] sm:$0xff]
    %v421 = vld [vmem:[#allocation8 + $0x28] sm:$0xff]
    %v422 = vld [vmem:[#allocation8 + $0x30] sm:$0xff]
    %v423 = vld [vmem:[#allocation8 + $0x38] sm:$0xff]
    %v424 = vld [vmem:[#allocation8 + $0x40] sm:$0xff]
    %v425 = vld [vmem:[#allocation8 + $0x48] sm:$0xff]
    %v426 = vld [vmem:[#allocation8 + $0x50] sm:$0xff]
    %v427 = vld [vmem:[#allocation8 + $0x58] sm:$0xff]
    %v428 = vld [vmem:[#allocation8 + $0x60] sm:$0xff]
    %v429 = vld [vmem:[#allocation8 + $0x68] sm:$0xff]
    %v430 = vld [vmem:[#allocation8 + $0x70] sm:$0xff]
    %v431 = vld [vmem:[#allocation8 + $0x78] sm:$0xff]
    %v432 = vld [vmem:[#allocation8 + $0x80] sm:$0xff]
    %v433 = vld [vmem:[#allocation8 + $0x88] sm:$0xff]
    %v434 = vld [vmem:[#allocation8 + $0x90] sm:$0xff]
    %v435 = vld [vmem:[#allocation8 + $0x98] sm:$0xff]
    %v436 = vld [vmem:[#allocation8 + $0xa0] sm:$0xff]
    %v437 = vld [vmem:[#allocation8 + $0xa8] sm:$0xff]
    %v438 = vld [vmem:[#allocation8 + $0xb0] sm:$0xff]
    %v439 = vld [vmem:[#allocation8 + $0xb8] sm:$0xff]
    %v440 = vld [vmem:[#allocation8 + $0xc0] sm:$0xff]
    %v441 = vld [vmem:[#allocation8 + $0xc8] sm:$0xff]
    %v442 = vld [vmem:[#allocation8 + $0xd0] sm:$0xff]
    %v443 = vld [vmem:[#allocation8 + $0xd8] sm:$0xff]
    %v444 = vld [vmem:[#allocation8 + $0xe0] sm:$0xff]
    %v445 = vld [vmem:[#allocation8 + $0xe8] sm:$0xff]
    %v446 = vld [vmem:[#allocation8 + $0xf0] sm:$0xff]
    %v447 = vld [vmem:[#allocation8 + $0xf8] sm:$0xff]
    %v448 = vld [vmem:[#allocation8 + $0x100] sm:$0xff]
    %v449 = vld [vmem:[#allocation8 + $0x108] sm:$0xff]
    %v450 = vld [vmem:[#allocation8 + $0x110] sm:$0xff]
    %v451 = vld [vmem:[#allocation8 + $0x118] sm:$0xff]
    %v452 = vld [vmem:[#allocation8 + $0x120] sm:$0xff]
    %v453 = vld [vmem:[#allocation8 + $0x128] sm:$0xff]
    %v454 = vld [vmem:[#allocation8 + $0x130] sm:$0xff]
    %v455 = vld [vmem:[#allocation8 + $0x138] sm:$0xff]
    %v456 = vld [vmem:[#allocation8 + $0x140] sm:$0xff]
    %v457 = vld [vmem:[#allocation8 + $0x148] sm:$0xff]
    %v458 = vld [vmem:[#allocation8 + $0x150] sm:$0xff]
    %v459 = vld [vmem:[#allocation8 + $0x158] sm:$0xff]
    %v460 = vld [vmem:[#allocation8 + $0x160] sm:$0xff]
    %v461 = vld [vmem:[#allocation8 + $0x168] sm:$0xff]
    %v462 = vld [vmem:[#allocation8 + $0x170] sm:$0xff]
    %v463 = vld [vmem:[#allocation8 + $0x178] sm:$0xff]
    %v464 = vld [vmem:[#allocation8 + $0x180] sm:$0xff]
    %v465 = vld [vmem:[#allocation8 + $0x188] sm:$0xff]
    %v466 = vld [vmem:[#allocation8 + $0x190] sm:$0xff]
    %v467 = vld [vmem:[#allocation8 + $0x198] sm:$0xff]
    %v468 = vld [vmem:[#allocation8 + $0x1a0] sm:$0xff]
    %v469 = vld [vmem:[#allocation8 + $0x1a8] sm:$0xff]
    %v470 = vld [vmem:[#allocation8 + $0x1b0] sm:$0xff]
    %v471 = vld [vmem:[#allocation8 + $0x1b8] sm:$0xff]
    %v472 = vld [vmem:[#allocation8 + $0x1c0] sm:$0xff]
    %v473 = vld [vmem:[#allocation8 + $0x1c8] sm:$0xff]
    %v474 = vld [vmem:[#allocation8 + $0x1d0] sm:$0xff]
    %v475 = vld [vmem:[#allocation8 + $0x1d8] sm:$0xff]
    %v476 = vld [vmem:[#allocation8 + $0x1e0] sm:$0xff]
    %v477 = vld [vmem:[#allocation8 + $0x1e8] sm:$0xff]
    %v478 = vld [vmem:[#allocation8 + $0x1f0] sm:$0xff]
    %v479 = vld [vmem:[#allocation8 + $0x1f8] sm:$0xff]
    %v480 = vld [vmem:[#allocation8 + $0x200] sm:$0xff]
    %v481 = vld [vmem:[#allocation8 + $0x208] sm:$0xff]
    %v482 = vld [vmem:[#allocation8 + $0x210] sm:$0xff]
    %v483 = vld [vmem:[#allocation8 + $0x218] sm:$0xff]
    %v484 = vld [vmem:[#allocation8 + $0x220] sm:$0xff]
    %v485 = vld [vmem:[#allocation8 + $0x228] sm:$0xff]
    %v486 = vld [vmem:[#allocation8 + $0x230] sm:$0xff]
    %v487 = vld [vmem:[#allocation8 + $0x238] sm:$0xff]
    %v488 = vld [vmem:[#allocation8 + $0x240] sm:$0xff]
    %v489 = vld [vmem:[#allocation8 + $0x248] sm:$0xff]
    %v490 = vld [vmem:[#allocation8 + $0x250] sm:$0xff]
    %v491 = vld [vmem:[#allocation8 + $0x258] sm:$0xff]
    %v492 = vld [vmem:[#allocation8 + $0x260] sm:$0xff]
    %v493 = vld [vmem:[#allocation8 + $0x268] sm:$0xff]
    %v494 = vld [vmem:[#allocation8 + $0x270] sm:$0xff]
    %v495 = vld [vmem:[#allocation8 + $0x278] sm:$0xff]
    %v496 = vld [vmem:[#allocation8 + $0x280] sm:$0xff]
    %v497 = vld [vmem:[#allocation8 + $0x288] sm:$0xff]
    %v498 = vld [vmem:[#allocation8 + $0x290] sm:$0xff]
    %v499 = vld [vmem:[#allocation8 + $0x298] sm:$0xff]
    %v500 = vld [vmem:[#allocation8 + $0x2a0] sm:$0xff]
    %v501 = vld [vmem:[#allocation8 + $0x2a8] sm:$0xff]
    %v502 = vld [vmem:[#allocation8 + $0x2b0] sm:$0xff]
    %v503 = vld [vmem:[#allocation8 + $0x2b8] sm:$0xff]
    %v504 = vld [vmem:[#allocation8 + $0x2c0] sm:$0xff]
    %v505 = vld [vmem:[#allocation8 + $0x2c8] sm:$0xff]
    %v506 = vld [vmem:[#allocation8 + $0x2d0] sm:$0xff]
    %v507 = vld [vmem:[#allocation8 + $0x2d8] sm:$0xff]
    %v508 = vld [vmem:[#allocation8 + $0x2e0] sm:$0xff]
    %v509 = vld [vmem:[#allocation8 + $0x2e8] sm:$0xff]
    %v510 = vld [vmem:[#allocation8 + $0x2f0] sm:$0xff]
    %v511 = vld [vmem:[#allocation8 + $0x2f8] sm:$0xff]
    %v512 = vld [vmem:[#allocation8 + $0x300] sm:$0xff]
    %v513 = vld [vmem:[#allocation8 + $0x308] sm:$0xff]
    %v514 = vld [vmem:[#allocation8 + $0x310] sm:$0xff]
    %v515 = vld [vmem:[#allocation8 + $0x318] sm:$0xff]
    %v516 = vld [vmem:[#allocation8 + $0x320] sm:$0xff]
    %v517 = vld [vmem:[#allocation8 + $0x328] sm:$0xff]
    %v518 = vld [vmem:[#allocation8 + $0x330] sm:$0xff]
    %v519 = vld [vmem:[#allocation8 + $0x338] sm:$0xff]
    %v520 = vld [vmem:[#allocation8 + $0x340] sm:$0xff]
    %v521 = vld [vmem:[#allocation8 + $0x348] sm:$0xff]
    %v522 = vld [vmem:[#allocation8 + $0x350] sm:$0xff]
    %v523 = vld [vmem:[#allocation8 + $0x358] sm:$0xff]
    %v524 = vld [vmem:[#allocation8 + $0x360] sm:$0xff]
    %v525 = vld [vmem:[#allocation8 + $0x368] sm:$0xff]
    %v526 = vld [vmem:[#allocation8 + $0x370] sm:$0xff]
    %v527 = vld [vmem:[#allocation8 + $0x378] sm:$0xff]
    %v528 = vld [vmem:[#allocation8 + $0x380] sm:$0xff]
    %v529 = vld [vmem:[#allocation8 + $0x388] sm:$0xff]
    %v530 = vld [vmem:[#allocation8 + $0x390] sm:$0xff]
    %v531 = vld [vmem:[#allocation8 + $0x398] sm:$0xff]
    %v532 = vld [vmem:[#allocation8 + $0x3a0] sm:$0xff]
    %v533 = vld [vmem:[#allocation8 + $0x3a8] sm:$0xff]
    %v534 = vld [vmem:[#allocation8 + $0x3b0] sm:$0xff]
    %v535 = vld [vmem:[#allocation8 + $0x3b8] sm:$0xff]
    %v536 = vld [vmem:[#allocation8 + $0x3c0] sm:$0xff]
    %v537 = vld [vmem:[#allocation8 + $0x3c8] sm:$0xff]
    %v538 = vld [vmem:[#allocation8 + $0x3d0] sm:$0xff]
    %v539 = vld [vmem:[#allocation8 + $0x3d8] sm:$0xff]
    %v540 = vld [vmem:[#allocation8 + $0x3e0] sm:$0xff]
    %v541 = vld [vmem:[#allocation8 + $0x3e8] sm:$0xff]
    %v542 = vld [vmem:[#allocation8 + $0x3f0] sm:$0xff]
    %v543 = vld [vmem:[#allocation8 + $0x3f8] sm:$0xff]
    %v544 = vld [vmem:[#allocation8 + $0x400] sm:$0xff]
    %v545 = vld [vmem:[#allocation8 + $0x408] sm:$0xff]
    %v546 = vld [vmem:[#allocation8 + $0x410] sm:$0xff]
    %v547 = vld [vmem:[#allocation8 + $0x418] sm:$0xff]
    %v548 = vld [vmem:[#allocation8 + $0x420] sm:$0xff]
    %v549 = vld [vmem:[#allocation8 + $0x428] sm:$0xff]
    %v550 = vld [vmem:[#allocation8 + $0x430] sm:$0xff]
    %v551 = vld [vmem:[#allocation8 + $0x438] sm:$0xff]
    %v552 = vld [vmem:[#allocation8 + $0x440] sm:$0xff]
    %v553 = vld [vmem:[#allocation8 + $0x448] sm:$0xff]
    %v554 = vld [vmem:[#allocation8 + $0x450] sm:$0xff]
    %v555 = vld [vmem:[#allocation8 + $0x458] sm:$0xff]
    %v556 = vld [vmem:[#allocation8 + $0x460] sm:$0xff]
    %v557 = vld [vmem:[#allocation8 + $0x468] sm:$0xff]
    %v558 = vld [vmem:[#allocation8 + $0x470] sm:$0xff]
    %v559 = vld [vmem:[#allocation8 + $0x478] sm:$0xff]
    %v560 = vld [vmem:[#allocation8 + $0x480] sm:$0xff]
    %v561 = vld [vmem:[#allocation8 + $0x488] sm:$0xff]
    %v562 = vld [vmem:[#allocation8 + $0x490] sm:$0xff]
    %v563 = vld [vmem:[#allocation8 + $0x498] sm:$0xff]
    %v564 = vld [vmem:[#allocation8 + $0x4a0] sm:$0xff]
    %v565 = vld [vmem:[#allocation8 + $0x4a8] sm:$0xff]
    %v566 = vld [vmem:[#allocation8 + $0x4b0] sm:$0xff]
    %v567 = vld [vmem:[#allocation8 + $0x4b8] sm:$0xff]
    %v568 = vld [vmem:[#allocation8 + $0x4c0] sm:$0xff]
    %v569 = vld [vmem:[#allocation8 + $0x4c8] sm:$0xff]
    %v570 = vld [vmem:[#allocation8 + $0x4d0] sm:$0xff]
    %v571 = vld [vmem:[#allocation8 + $0x4d8] sm:$0xff]
    %v572 = vld [vmem:[#allocation8 + $0x4e0] sm:$0xff]
    %v573 = vld [vmem:[#allocation8 + $0x4e8] sm:$0xff]
    %v574 = vld [vmem:[#allocation8 + $0x4f0] sm:$0xff]
    %v575 = vld [vmem:[#allocation8 + $0x4f8] sm:$0xff]
    %v576 = vld [vmem:[#allocation8 + $0x500] sm:$0xff]
    %v577 = vld [vmem:[#allocation8 + $0x508] sm:$0xff]
    %v578 = vld [vmem:[#allocation8 + $0x510] sm:$0xff]
    %v579 = vld [vmem:[#allocation8 + $0x518] sm:$0xff]
    %v580 = vld [vmem:[#allocation8 + $0x520] sm:$0xff]
    %v581 = vld [vmem:[#allocation8 + $0x528] sm:$0xff]
    %v582 = vld [vmem:[#allocation8 + $0x530] sm:$0xff]
    %v583 = vld [vmem:[#allocation8 + $0x538] sm:$0xff]
    %v584 = vld [vmem:[#allocation8 + $0x540] sm:$0xff]
    %v585 = vld [vmem:[#allocation8 + $0x548] sm:$0xff]
    %v586 = vld [vmem:[#allocation8 + $0x550] sm:$0xff]
    %v587 = vld [vmem:[#allocation8 + $0x558] sm:$0xff]
    %v588 = vld [vmem:[#allocation8 + $0x560] sm:$0xff]
    %v589 = vld [vmem:[#allocation8 + $0x568] sm:$0xff]
    %v590 = vld [vmem:[#allocation8 + $0x570] sm:$0xff]
    %v591 = vld [vmem:[#allocation8 + $0x578] sm:$0xff]
    %v592 = vld [vmem:[#allocation8 + $0x580] sm:$0xff]
    %v593 = vld [vmem:[#allocation8 + $0x588] sm:$0xff]
    %v594 = vld [vmem:[#allocation8 + $0x590] sm:$0xff]
    %v595 = vld [vmem:[#allocation8 + $0x598] sm:$0xff]
    %v596 = vld [vmem:[#allocation8 + $0x5a0] sm:$0xff]
    %v597 = vld [vmem:[#allocation8 + $0x5a8] sm:$0xff]
    %v598 = vld [vmem:[#allocation8 + $0x5b0] sm:$0xff]
    %v599 = vld [vmem:[#allocation8 + $0x5b8] sm:$0xff]
    %v600 = vld [vmem:[#allocation8 + $0x5c0] sm:$0xff]
    %v601 = vld [vmem:[#allocation8 + $0x5c8] sm:$0xff]
    %v602 = vld [vmem:[#allocation8 + $0x5d0] sm:$0xff]
    %v603 = vld [vmem:[#allocation8 + $0x5d8] sm:$0xff]
    %v604 = vld [vmem:[#allocation8 + $0x5e0] sm:$0xff]
    %v605 = vld [vmem:[#allocation8 + $0x5e8] sm:$0xff]
    %v606 = vld [vmem:[#allocation8 + $0x5f0] sm:$0xff]
    %v607 = vld [vmem:[#allocation8 + $0x5f8] sm:$0xff]
    %v608 = vld [vmem:[#allocation8 + $0x600] sm:$0xff]
    %v609 = vld [vmem:[#allocation8 + $0x608] sm:$0xff]
    %v610 = vld [vmem:[#allocation8 + $0x610] sm:$0xff]
    %v611 = vld [vmem:[#allocation8 + $0x618] sm:$0xff]
    %v612 = vld [vmem:[#allocation8 + $0x620] sm:$0xff]
    %v613 = vld [vmem:[#allocation8 + $0x628] sm:$0xff]
    %v614 = vld [vmem:[#allocation8 + $0x630] sm:$0xff]
    %v615 = vld [vmem:[#allocation8 + $0x638] sm:$0xff]
    %v616 = vld [vmem:[#allocation8 + $0x640] sm:$0xff]
    %v617 = vld [vmem:[#allocation8 + $0x648] sm:$0xff]
    %v618 = vld [vmem:[#allocation8 + $0x650] sm:$0xff]
    %v619 = vld [vmem:[#allocation8 + $0x658] sm:$0xff]
    %v620 = vld [vmem:[#allocation8 + $0x660] sm:$0xff]
    %v621 = vld [vmem:[#allocation8 + $0x668] sm:$0xff]
    %v622 = vld [vmem:[#allocation8 + $0x670] sm:$0xff]
    %v623 = vld [vmem:[#allocation8 + $0x678] sm:$0xff]
    %v624 = vld [vmem:[#allocation8 + $0x680] sm:$0xff]
    %v625 = vld [vmem:[#allocation8 + $0x688] sm:$0xff]
    %v626 = vld [vmem:[#allocation8 + $0x690] sm:$0xff]
    %v627 = vld [vmem:[#allocation8 + $0x698] sm:$0xff]
    %v628 = vld [vmem:[#allocation8 + $0x6a0] sm:$0xff]
    %v629 = vld [vmem:[#allocation8 + $0x6a8] sm:$0xff]
    %v630 = vld [vmem:[#allocation8 + $0x6b0] sm:$0xff]
    %v631 = vld [vmem:[#allocation8 + $0x6b8] sm:$0xff]
    %v632 = vld [vmem:[#allocation8 + $0x6c0] sm:$0xff]
    %v633 = vld [vmem:[#allocation8 + $0x6c8] sm:$0xff]
    %v634 = vld [vmem:[#allocation8 + $0x6d0] sm:$0xff]
    %v635 = vld [vmem:[#allocation8 + $0x6d8] sm:$0xff]
    %v636 = vld [vmem:[#allocation8 + $0x6e0] sm:$0xff]
    %v637 = vld [vmem:[#allocation8 + $0x6e8] sm:$0xff]
    %v638 = vld [vmem:[#allocation8 + $0x6f0] sm:$0xff]
    %v639 = vld [vmem:[#allocation8 + $0x6f8] sm:$0xff]
    %v640 = vld [vmem:[#allocation8 + $0x700] sm:$0xff]
    %v641 = vld [vmem:[#allocation8 + $0x708] sm:$0xff]
    %v642 = vld [vmem:[#allocation8 + $0x710] sm:$0xff]
    %v643 = vld [vmem:[#allocation8 + $0x718] sm:$0xff]
    %v644 = vld [vmem:[#allocation8 + $0x720] sm:$0xff]
    %v645 = vld [vmem:[#allocation8 + $0x728] sm:$0xff]
    %v646 = vld [vmem:[#allocation8 + $0x730] sm:$0xff]
    %v647 = vld [vmem:[#allocation8 + $0x738] sm:$0xff]
    %v648 = vld [vmem:[#allocation8 + $0x740] sm:$0xff]
    %v649 = vld [vmem:[#allocation8 + $0x748] sm:$0xff]
    %v650 = vld [vmem:[#allocation8 + $0x750] sm:$0xff]
    %v651 = vld [vmem:[#allocation8 + $0x758] sm:$0xff]
    %v652 = vld [vmem:[#allocation8 + $0x760] sm:$0xff]
    %v653 = vld [vmem:[#allocation8 + $0x768] sm:$0xff]
    %v654 = vld [vmem:[#allocation8 + $0x770] sm:$0xff]
    %v655 = vld [vmem:[#allocation8 + $0x778] sm:$0xff]
    %v656 = vld [vmem:[#allocation8 + $0x780] sm:$0xff]
    %v657 = vld [vmem:[#allocation8 + $0x788] sm:$0xff]
    %v658 = vld [vmem:[#allocation8 + $0x790] sm:$0xff]
    %v659 = vld [vmem:[#allocation8 + $0x798] sm:$0xff]
    %v660 = vld [vmem:[#allocation8 + $0x7a0] sm:$0xff]
    %v661 = vld [vmem:[#allocation8 + $0x7a8] sm:$0xff]
    %v662 = vld [vmem:[#allocation8 + $0x7b0] sm:$0xff]
    %v663 = vld [vmem:[#allocation8 + $0x7b8] sm:$0xff]
    %v664 = vld [vmem:[#allocation8 + $0x7c0] sm:$0xff]
    %v665 = vld [vmem:[#allocation8 + $0x7c8] sm:$0xff]
    %v666 = vld [vmem:[#allocation8 + $0x7d0] sm:$0xff]
    %v667 = vld [vmem:[#allocation8 + $0x7d8] sm:$0xff]
    %v668 = vld [vmem:[#allocation8 + $0x7e0] sm:$0xff]
    %v669 = vld [vmem:[#allocation8 + $0x7e8] sm:$0xff]
    %v670 = vld [vmem:[#allocation8 + $0x7f0] sm:$0xff]
    %v671 = vld [vmem:[#allocation8 + $0x7f8] sm:$0xff]
    %v672 = vld [vmem:[%s4] sm:$0xf]
    %v674 = vlaneseq
    %v675 = vshrl.u32 %v674, 7
    %v676 = vsub.s32 0, %v675
    %v677 = vrot.slane %v672, %v676
    %v678 = vlaneseq
    %v679 = vshrl.u32 %v678, 7
    %v680 = vsub.s32 1, %v679
    %v681 = vrot.slane %v672, %v680
    %v682 = vlaneseq
    %v683 = vshrl.u32 %v682, 7
    %v684 = vsub.s32 2, %v683
    %v685 = vrot.slane %v672, %v684
    %v686 = vlaneseq
    %v687 = vshrl.u32 %v686, 7
    %v688 = vsub.s32 3, %v687
    %v689 = vrot.slane %v672, %v688
    %v950 = vunpack.c.l.b16 %v416
    %v951 = vunpack.c.h.b16 %v416
    %v952 = vunpack.c.l.b16 %v417
    %v953 = vunpack.c.h.b16 %v417
    %v954 = vunpack.c.l.b16 %v418
    %v955 = vunpack.c.h.b16 %v418
    %v956 = vunpack.c.l.b16 %v419
    %v957 = vunpack.c.h.b16 %v419
    %v958 = vunpack.c.l.b16 %v420
    %v959 = vunpack.c.h.b16 %v420
    %v960 = vunpack.c.l.b16 %v421
    %v961 = vunpack.c.h.b16 %v421
    %v962 = vunpack.c.l.b16 %v422
    %v963 = vunpack.c.h.b16 %v422
    %v964 = vunpack.c.l.b16 %v423
    %v965 = vunpack.c.h.b16 %v423
    %v966 = vunpack.c.l.b16 %v424
    %v967 = vunpack.c.h.b16 %v424
    %v968 = vunpack.c.l.b16 %v425
    %v969 = vunpack.c.h.b16 %v425
    %v970 = vunpack.c.l.b16 %v426
    %v971 = vunpack.c.h.b16 %v426
    %v972 = vunpack.c.l.b16 %v427
    %v973 = vunpack.c.h.b16 %v427
    %v974 = vunpack.c.l.b16 %v428
    %v975 = vunpack.c.h.b16 %v428
    %v976 = vunpack.c.l.b16 %v429
    %v977 = vunpack.c.h.b16 %v429
    %v978 = vunpack.c.l.b16 %v430
    %v979 = vunpack.c.h.b16 %v430
    %v980 = vunpack.c.l.b16 %v431
    %v981 = vunpack.c.h.b16 %v431
    %v982 = vunpack.c.l.b16 %v432
    %v983 = vunpack.c.h.b16 %v432
    %v984 = vunpack.c.l.b16 %v433
    %v985 = vunpack.c.h.b16 %v433
    %v986 = vunpack.c.l.b16 %v434
    %v987 = vunpack.c.h.b16 %v434
    %v988 = vunpack.c.l.b16 %v435
    %v989 = vunpack.c.h.b16 %v435
    %v990 = vunpack.c.l.b16 %v436
    %v991 = vunpack.c.h.b16 %v436
    %v992 = vunpack.c.l.b16 %v437
    %v993 = vunpack.c.h.b16 %v437
    %v994 = vunpack.c.l.b16 %v438
    %v995 = vunpack.c.h.b16 %v438
    %v996 = vunpack.c.l.b16 %v439
    %v997 = vunpack.c.h.b16 %v439
    %v998 = vunpack.c.l.b16 %v440
    %v999 = vunpack.c.h.b16 %v440
    %v1000 = vunpack.c.l.b16 %v441
    %v1001 = vunpack.c.h.b16 %v441
    %v1002 = vunpack.c.l.b16 %v442
    %v1003 = vunpack.c.h.b16 %v442
    %v1004 = vunpack.c.l.b16 %v443
    %v1005 = vunpack.c.h.b16 %v443
    %v1006 = vunpack.c.l.b16 %v444
    %v1007 = vunpack.c.h.b16 %v444
    %v1008 = vunpack.c.l.b16 %v445
    %v1009 = vunpack.c.h.b16 %v445
    %v1010 = vunpack.c.l.b16 %v446
    %v1011 = vunpack.c.h.b16 %v446
    %v1012 = vunpack.c.l.b16 %v447
    %v1013 = vunpack.c.h.b16 %v447
    %v1014 = vunpack.c.l.b16 %v448
    %v1015 = vunpack.c.h.b16 %v448
    %v1016 = vunpack.c.l.b16 %v449
    %v1017 = vunpack.c.h.b16 %v449
    %v1018 = vunpack.c.l.b16 %v450
    %v1019 = vunpack.c.h.b16 %v450
    %v1020 = vunpack.c.l.b16 %v451
    %v1021 = vunpack.c.h.b16 %v451
    %v1022 = vunpack.c.l.b16 %v452
    %v1023 = vunpack.c.h.b16 %v452
    %v1024 = vunpack.c.l.b16 %v453
    %v1025 = vunpack.c.h.b16 %v453
    %v1026 = vunpack.c.l.b16 %v454
    %v1027 = vunpack.c.h.b16 %v454
    %v1028 = vunpack.c.l.b16 %v455
    %v1029 = vunpack.c.h.b16 %v455
    %v1030 = vunpack.c.l.b16 %v456
    %v1031 = vunpack.c.h.b16 %v456
    %v1032 = vunpack.c.l.b16 %v457
    %v1033 = vunpack.c.h.b16 %v457
    %v1034 = vunpack.c.l.b16 %v458
    %v1035 = vunpack.c.h.b16 %v458
    %v1036 = vunpack.c.l.b16 %v459
    %v1037 = vunpack.c.h.b16 %v459
    %v1038 = vunpack.c.l.b16 %v460
    %v1039 = vunpack.c.h.b16 %v460
    %v1040 = vunpack.c.l.b16 %v461
    %v1041 = vunpack.c.h.b16 %v461
    %v1042 = vunpack.c.l.b16 %v462
    %v1043 = vunpack.c.h.b16 %v462
    %v1044 = vunpack.c.l.b16 %v463
    %v1045 = vunpack.c.h.b16 %v463
    %v1046 = vunpack.c.l.b16 %v464
    %v1047 = vunpack.c.h.b16 %v464
    %v1048 = vunpack.c.l.b16 %v465
    %v1049 = vunpack.c.h.b16 %v465
    %v1050 = vunpack.c.l.b16 %v466
    %v1051 = vunpack.c.h.b16 %v466
    %v1052 = vunpack.c.l.b16 %v467
    %v1053 = vunpack.c.h.b16 %v467
    %v1054 = vunpack.c.l.b16 %v468
    %v1055 = vunpack.c.h.b16 %v468
    %v1056 = vunpack.c.l.b16 %v469
    %v1057 = vunpack.c.h.b16 %v469
    %v1058 = vunpack.c.l.b16 %v470
    %v1059 = vunpack.c.h.b16 %v470
    %v1060 = vunpack.c.l.b16 %v471
    %v1061 = vunpack.c.h.b16 %v471
    %v1062 = vunpack.c.l.b16 %v472
    %v1063 = vunpack.c.h.b16 %v472
    %v1064 = vunpack.c.l.b16 %v473
    %v1065 = vunpack.c.h.b16 %v473
    %v1066 = vunpack.c.l.b16 %v474
    %v1067 = vunpack.c.h.b16 %v474
    %v1068 = vunpack.c.l.b16 %v475
    %v1069 = vunpack.c.h.b16 %v475
    %v1070 = vunpack.c.l.b16 %v476
    %v1071 = vunpack.c.h.b16 %v476
    %v1072 = vunpack.c.l.b16 %v477
    %v1073 = vunpack.c.h.b16 %v477
    %v1074 = vunpack.c.l.b16 %v478
    %v1075 = vunpack.c.h.b16 %v478
    %v1076 = vunpack.c.l.b16 %v479
    %v1077 = vunpack.c.h.b16 %v479
    %v1078 = vunpack.c.l.b16 %v480
    %v1079 = vunpack.c.h.b16 %v480
    %v1080 = vunpack.c.l.b16 %v481
    %v1081 = vunpack.c.h.b16 %v481
    %v1082 = vunpack.c.l.b16 %v482
    %v1083 = vunpack.c.h.b16 %v482
    %v1084 = vunpack.c.l.b16 %v483
    %v1085 = vunpack.c.h.b16 %v483
    %v1086 = vunpack.c.l.b16 %v484
    %v1087 = vunpack.c.h.b16 %v484
    %v1088 = vunpack.c.l.b16 %v485
    %v1089 = vunpack.c.h.b16 %v485
    %v1090 = vunpack.c.l.b16 %v486
    %v1091 = vunpack.c.h.b16 %v486
    %v1092 = vunpack.c.l.b16 %v487
    %v1093 = vunpack.c.h.b16 %v487
    %v1094 = vunpack.c.l.b16 %v488
    %v1095 = vunpack.c.h.b16 %v488
    %v1096 = vunpack.c.l.b16 %v489
    %v1097 = vunpack.c.h.b16 %v489
    %v1098 = vunpack.c.l.b16 %v490
    %v1099 = vunpack.c.h.b16 %v490
    %v1100 = vunpack.c.l.b16 %v491
    %v1101 = vunpack.c.h.b16 %v491
    %v1102 = vunpack.c.l.b16 %v492
    %v1103 = vunpack.c.h.b16 %v492
    %v1104 = vunpack.c.l.b16 %v493
    %v1105 = vunpack.c.h.b16 %v493
    %v1106 = vunpack.c.l.b16 %v494
    %v1107 = vunpack.c.h.b16 %v494
    %v1108 = vunpack.c.l.b16 %v495
    %v1109 = vunpack.c.h.b16 %v495
    %v1110 = vunpack.c.l.b16 %v496
    %v1111 = vunpack.c.h.b16 %v496
    %v1112 = vunpack.c.l.b16 %v497
    %v1113 = vunpack.c.h.b16 %v497
    %v1114 = vunpack.c.l.b16 %v498
    %v1115 = vunpack.c.h.b16 %v498
    %v1116 = vunpack.c.l.b16 %v499
    %v1117 = vunpack.c.h.b16 %v499
    %v1118 = vunpack.c.l.b16 %v500
    %v1119 = vunpack.c.h.b16 %v500
    %v1120 = vunpack.c.l.b16 %v501
    %v1121 = vunpack.c.h.b16 %v501
    %v1122 = vunpack.c.l.b16 %v502
    %v1123 = vunpack.c.h.b16 %v502
    %v1124 = vunpack.c.l.b16 %v503
    %v1125 = vunpack.c.h.b16 %v503
    %v1126 = vunpack.c.l.b16 %v504
    %v1127 = vunpack.c.h.b16 %v504
    %v1128 = vunpack.c.l.b16 %v505
    %v1129 = vunpack.c.h.b16 %v505
    %v1130 = vunpack.c.l.b16 %v506
    %v1131 = vunpack.c.h.b16 %v506
    %v1132 = vunpack.c.l.b16 %v507
    %v1133 = vunpack.c.h.b16 %v507
    %v1134 = vunpack.c.l.b16 %v508
    %v1135 = vunpack.c.h.b16 %v508
    %v1136 = vunpack.c.l.b16 %v509
    %v1137 = vunpack.c.h.b16 %v509
    %v1138 = vunpack.c.l.b16 %v510
    %v1139 = vunpack.c.h.b16 %v510
    %v1140 = vunpack.c.l.b16 %v511
    %v1141 = vunpack.c.h.b16 %v511
    %v1142 = vunpack.c.l.b16 %v512
    %v1143 = vunpack.c.h.b16 %v512
    %v1144 = vunpack.c.l.b16 %v513
    %v1145 = vunpack.c.h.b16 %v513
    %v1146 = vunpack.c.l.b16 %v514
    %v1147 = vunpack.c.h.b16 %v514
    %v1148 = vunpack.c.l.b16 %v515
    %v1149 = vunpack.c.h.b16 %v515
    %v1150 = vunpack.c.l.b16 %v516
    %v1151 = vunpack.c.h.b16 %v516
    %v1152 = vunpack.c.l.b16 %v517
    %v1153 = vunpack.c.h.b16 %v517
    %v1154 = vunpack.c.l.b16 %v518
    %v1155 = vunpack.c.h.b16 %v518
    %v1156 = vunpack.c.l.b16 %v519
    %v1157 = vunpack.c.h.b16 %v519
    %v1158 = vunpack.c.l.b16 %v520
    %v1159 = vunpack.c.h.b16 %v520
    %v1160 = vunpack.c.l.b16 %v521
    %v1161 = vunpack.c.h.b16 %v521
    %v1162 = vunpack.c.l.b16 %v522
    %v1163 = vunpack.c.h.b16 %v522
    %v1164 = vunpack.c.l.b16 %v523
    %v1165 = vunpack.c.h.b16 %v523
    %v1166 = vunpack.c.l.b16 %v524
    %v1167 = vunpack.c.h.b16 %v524
    %v1168 = vunpack.c.l.b16 %v525
    %v1169 = vunpack.c.h.b16 %v525
    %v1170 = vunpack.c.l.b16 %v526
    %v1171 = vunpack.c.h.b16 %v526
    %v1172 = vunpack.c.l.b16 %v527
    %v1173 = vunpack.c.h.b16 %v527
    %v1174 = vunpack.c.l.b16 %v528
    %v1175 = vunpack.c.h.b16 %v528
    %v1176 = vunpack.c.l.b16 %v529
    %v1177 = vunpack.c.h.b16 %v529
    %v1178 = vunpack.c.l.b16 %v530
    %v1179 = vunpack.c.h.b16 %v530
    %v1180 = vunpack.c.l.b16 %v531
    %v1181 = vunpack.c.h.b16 %v531
    %v1182 = vunpack.c.l.b16 %v532
    %v1183 = vunpack.c.h.b16 %v532
    %v1184 = vunpack.c.l.b16 %v533
    %v1185 = vunpack.c.h.b16 %v533
    %v1186 = vunpack.c.l.b16 %v534
    %v1187 = vunpack.c.h.b16 %v534
    %v1188 = vunpack.c.l.b16 %v535
    %v1189 = vunpack.c.h.b16 %v535
    %v1190 = vunpack.c.l.b16 %v536
    %v1191 = vunpack.c.h.b16 %v536
    %v1192 = vunpack.c.l.b16 %v537
    %v1193 = vunpack.c.h.b16 %v537
    %v1194 = vunpack.c.l.b16 %v538
    %v1195 = vunpack.c.h.b16 %v538
    %v1196 = vunpack.c.l.b16 %v539
    %v1197 = vunpack.c.h.b16 %v539
    %v1198 = vunpack.c.l.b16 %v540
    %v1199 = vunpack.c.h.b16 %v540
    %v1200 = vunpack.c.l.b16 %v541
    %v1201 = vunpack.c.h.b16 %v541
    %v1202 = vunpack.c.l.b16 %v542
    %v1203 = vunpack.c.h.b16 %v542
    %v1204 = vunpack.c.l.b16 %v543
    %v1205 = vunpack.c.h.b16 %v543
    %v1206 = vunpack.c.l.b16 %v544
    %v1207 = vunpack.c.h.b16 %v544
    %v1208 = vunpack.c.l.b16 %v545
    %v1209 = vunpack.c.h.b16 %v545
    %v1210 = vunpack.c.l.b16 %v546
    %v1211 = vunpack.c.h.b16 %v546
    %v1212 = vunpack.c.l.b16 %v547
    %v1213 = vunpack.c.h.b16 %v547
    %v1214 = vunpack.c.l.b16 %v548
    %v1215 = vunpack.c.h.b16 %v548
    %v1216 = vunpack.c.l.b16 %v549
    %v1217 = vunpack.c.h.b16 %v549
    %v1218 = vunpack.c.l.b16 %v550
    %v1219 = vunpack.c.h.b16 %v550
    %v1220 = vunpack.c.l.b16 %v551
    %v1221 = vunpack.c.h.b16 %v551
    %v1222 = vunpack.c.l.b16 %v552
    %v1223 = vunpack.c.h.b16 %v552
    %v1224 = vunpack.c.l.b16 %v553
    %v1225 = vunpack.c.h.b16 %v553
    %v1226 = vunpack.c.l.b16 %v554
    %v1227 = vunpack.c.h.b16 %v554
    %v1228 = vunpack.c.l.b16 %v555
    %v1229 = vunpack.c.h.b16 %v555
    %v1230 = vunpack.c.l.b16 %v556
    %v1231 = vunpack.c.h.b16 %v556
    %v1232 = vunpack.c.l.b16 %v557
    %v1233 = vunpack.c.h.b16 %v557
    %v1234 = vunpack.c.l.b16 %v558
    %v1235 = vunpack.c.h.b16 %v558
    %v1236 = vunpack.c.l.b16 %v559
    %v1237 = vunpack.c.h.b16 %v559
    %v1238 = vunpack.c.l.b16 %v560
    %v1239 = vunpack.c.h.b16 %v560
    %v1240 = vunpack.c.l.b16 %v561
    %v1241 = vunpack.c.h.b16 %v561
    %v1242 = vunpack.c.l.b16 %v562
    %v1243 = vunpack.c.h.b16 %v562
    %v1244 = vunpack.c.l.b16 %v563
    %v1245 = vunpack.c.h.b16 %v563
    %v1246 = vunpack.c.l.b16 %v564
    %v1247 = vunpack.c.h.b16 %v564
    %v1248 = vunpack.c.l.b16 %v565
    %v1249 = vunpack.c.h.b16 %v565
    %v1250 = vunpack.c.l.b16 %v566
    %v1251 = vunpack.c.h.b16 %v566
    %v1252 = vunpack.c.l.b16 %v567
    %v1253 = vunpack.c.h.b16 %v567
    %v1254 = vunpack.c.l.b16 %v568
    %v1255 = vunpack.c.h.b16 %v568
    %v1256 = vunpack.c.l.b16 %v569
    %v1257 = vunpack.c.h.b16 %v569
    %v1258 = vunpack.c.l.b16 %v570
    %v1259 = vunpack.c.h.b16 %v570
    %v1260 = vunpack.c.l.b16 %v571
    %v1261 = vunpack.c.h.b16 %v571
    %v1262 = vunpack.c.l.b16 %v572
    %v1263 = vunpack.c.h.b16 %v572
    %v1264 = vunpack.c.l.b16 %v573
    %v1265 = vunpack.c.h.b16 %v573
    %v1266 = vunpack.c.l.b16 %v574
    %v1267 = vunpack.c.h.b16 %v574
    %v1268 = vunpack.c.l.b16 %v575
    %v1269 = vunpack.c.h.b16 %v575
    %v1270 = vunpack.c.l.b16 %v576
    %v1271 = vunpack.c.h.b16 %v576
    %v1272 = vunpack.c.l.b16 %v577
    %v1273 = vunpack.c.h.b16 %v577
    %v1274 = vunpack.c.l.b16 %v578
    %v1275 = vunpack.c.h.b16 %v578
    %v1276 = vunpack.c.l.b16 %v579
    %v1277 = vunpack.c.h.b16 %v579
    %v1278 = vunpack.c.l.b16 %v580
    %v1279 = vunpack.c.h.b16 %v580
    %v1280 = vunpack.c.l.b16 %v581
    %v1281 = vunpack.c.h.b16 %v581
    %v1282 = vunpack.c.l.b16 %v582
    %v1283 = vunpack.c.h.b16 %v582
    %v1284 = vunpack.c.l.b16 %v583
    %v1285 = vunpack.c.h.b16 %v583
    %v1286 = vunpack.c.l.b16 %v584
    %v1287 = vunpack.c.h.b16 %v584
    %v1288 = vunpack.c.l.b16 %v585
    %v1289 = vunpack.c.h.b16 %v585
    %v1290 = vunpack.c.l.b16 %v586
    %v1291 = vunpack.c.h.b16 %v586
    %v1292 = vunpack.c.l.b16 %v587
    %v1293 = vunpack.c.h.b16 %v587
    %v1294 = vunpack.c.l.b16 %v588
    %v1295 = vunpack.c.h.b16 %v588
    %v1296 = vunpack.c.l.b16 %v589
    %v1297 = vunpack.c.h.b16 %v589
    %v1298 = vunpack.c.l.b16 %v590
    %v1299 = vunpack.c.h.b16 %v590
    %v1300 = vunpack.c.l.b16 %v591
    %v1301 = vunpack.c.h.b16 %v591
    %v1302 = vunpack.c.l.b16 %v592
    %v1303 = vunpack.c.h.b16 %v592
    %v1304 = vunpack.c.l.b16 %v593
    %v1305 = vunpack.c.h.b16 %v593
    %v1306 = vunpack.c.l.b16 %v594
    %v1307 = vunpack.c.h.b16 %v594
    %v1308 = vunpack.c.l.b16 %v595
    %v1309 = vunpack.c.h.b16 %v595
    %v1310 = vunpack.c.l.b16 %v596
    %v1311 = vunpack.c.h.b16 %v596
    %v1312 = vunpack.c.l.b16 %v597
    %v1313 = vunpack.c.h.b16 %v597
    %v1314 = vunpack.c.l.b16 %v598
    %v1315 = vunpack.c.h.b16 %v598
    %v1316 = vunpack.c.l.b16 %v599
    %v1317 = vunpack.c.h.b16 %v599
    %v1318 = vunpack.c.l.b16 %v600
    %v1319 = vunpack.c.h.b16 %v600
    %v1320 = vunpack.c.l.b16 %v601
    %v1321 = vunpack.c.h.b16 %v601
    %v1322 = vunpack.c.l.b16 %v602
    %v1323 = vunpack.c.h.b16 %v602
    %v1324 = vunpack.c.l.b16 %v603
    %v1325 = vunpack.c.h.b16 %v603
    %v1326 = vunpack.c.l.b16 %v604
    %v1327 = vunpack.c.h.b16 %v604
    %v1328 = vunpack.c.l.b16 %v605
    %v1329 = vunpack.c.h.b16 %v605
    %v1330 = vunpack.c.l.b16 %v606
    %v1331 = vunpack.c.h.b16 %v606
    %v1332 = vunpack.c.l.b16 %v607
    %v1333 = vunpack.c.h.b16 %v607
    %v1334 = vunpack.c.l.b16 %v608
    %v1335 = vunpack.c.h.b16 %v608
    %v1336 = vunpack.c.l.b16 %v609
    %v1337 = vunpack.c.h.b16 %v609
    %v1338 = vunpack.c.l.b16 %v610
    %v1339 = vunpack.c.h.b16 %v610
    %v1340 = vunpack.c.l.b16 %v611
    %v1341 = vunpack.c.h.b16 %v611
    %v1342 = vunpack.c.l.b16 %v612
    %v1343 = vunpack.c.h.b16 %v612
    %v1344 = vunpack.c.l.b16 %v613
    %v1345 = vunpack.c.h.b16 %v613
    %v1346 = vunpack.c.l.b16 %v614
    %v1347 = vunpack.c.h.b16 %v614
    %v1348 = vunpack.c.l.b16 %v615
    %v1349 = vunpack.c.h.b16 %v615
    %v1350 = vunpack.c.l.b16 %v616
    %v1351 = vunpack.c.h.b16 %v616
    %v1352 = vunpack.c.l.b16 %v617
    %v1353 = vunpack.c.h.b16 %v617
    %v1354 = vunpack.c.l.b16 %v618
    %v1355 = vunpack.c.h.b16 %v618
    %v1356 = vunpack.c.l.b16 %v619
    %v1357 = vunpack.c.h.b16 %v619
    %v1358 = vunpack.c.l.b16 %v620
    %v1359 = vunpack.c.h.b16 %v620
    %v1360 = vunpack.c.l.b16 %v621
    %v1361 = vunpack.c.h.b16 %v621
    %v1362 = vunpack.c.l.b16 %v622
    %v1363 = vunpack.c.h.b16 %v622
    %v1364 = vunpack.c.l.b16 %v623
    %v1365 = vunpack.c.h.b16 %v623
    %v1366 = vunpack.c.l.b16 %v624
    %v1367 = vunpack.c.h.b16 %v624
    %v1368 = vunpack.c.l.b16 %v625
    %v1369 = vunpack.c.h.b16 %v625
    %v1370 = vunpack.c.l.b16 %v626
    %v1371 = vunpack.c.h.b16 %v626
    %v1372 = vunpack.c.l.b16 %v627
    %v1373 = vunpack.c.h.b16 %v627
    %v1374 = vunpack.c.l.b16 %v628
    %v1375 = vunpack.c.h.b16 %v628
    %v1376 = vunpack.c.l.b16 %v629
    %v1377 = vunpack.c.h.b16 %v629
    %v1378 = vunpack.c.l.b16 %v630
    %v1379 = vunpack.c.h.b16 %v630
    %v1380 = vunpack.c.l.b16 %v631
    %v1381 = vunpack.c.h.b16 %v631
    %v1382 = vunpack.c.l.b16 %v632
    %v1383 = vunpack.c.h.b16 %v632
    %v1384 = vunpack.c.l.b16 %v633
    %v1385 = vunpack.c.h.b16 %v633
    %v1386 = vunpack.c.l.b16 %v634
    %v1387 = vunpack.c.h.b16 %v634
    %v1388 = vunpack.c.l.b16 %v635
    %v1389 = vunpack.c.h.b16 %v635
    %v1390 = vunpack.c.l.b16 %v636
    %v1391 = vunpack.c.h.b16 %v636
    %v1392 = vunpack.c.l.b16 %v637
    %v1393 = vunpack.c.h.b16 %v637
    %v1394 = vunpack.c.l.b16 %v638
    %v1395 = vunpack.c.h.b16 %v638
    %v1396 = vunpack.c.l.b16 %v639
    %v1397 = vunpack.c.h.b16 %v639
    %v1398 = vunpack.c.l.b16 %v640
    %v1399 = vunpack.c.h.b16 %v640
    %v1400 = vunpack.c.l.b16 %v641
    %v1401 = vunpack.c.h.b16 %v641
    %v1402 = vunpack.c.l.b16 %v642
    %v1403 = vunpack.c.h.b16 %v642
    %v1404 = vunpack.c.l.b16 %v643
    %v1405 = vunpack.c.h.b16 %v643
    %v1406 = vunpack.c.l.b16 %v644
    %v1407 = vunpack.c.h.b16 %v644
    %v1408 = vunpack.c.l.b16 %v645
    %v1409 = vunpack.c.h.b16 %v645
    %v1410 = vunpack.c.l.b16 %v646
    %v1411 = vunpack.c.h.b16 %v646
    %v1412 = vunpack.c.l.b16 %v647
    %v1413 = vunpack.c.h.b16 %v647
    %v1414 = vunpack.c.l.b16 %v648
    %v1415 = vunpack.c.h.b16 %v648
    %v1416 = vunpack.c.l.b16 %v649
    %v1417 = vunpack.c.h.b16 %v649
    %v1418 = vunpack.c.l.b16 %v650
    %v1419 = vunpack.c.h.b16 %v650
    %v1420 = vunpack.c.l.b16 %v651
    %v1421 = vunpack.c.h.b16 %v651
    %v1422 = vunpack.c.l.b16 %v652
    %v1423 = vunpack.c.h.b16 %v652
    %v1424 = vunpack.c.l.b16 %v653
    %v1425 = vunpack.c.h.b16 %v653
    %v1426 = vunpack.c.l.b16 %v654
    %v1427 = vunpack.c.h.b16 %v654
    %v1428 = vunpack.c.l.b16 %v655
    %v1429 = vunpack.c.h.b16 %v655
    %v1430 = vunpack.c.l.b16 %v656
    %v1431 = vunpack.c.h.b16 %v656
    %v1432 = vunpack.c.l.b16 %v657
    %v1433 = vunpack.c.h.b16 %v657
    %v1434 = vunpack.c.l.b16 %v658
    %v1435 = vunpack.c.h.b16 %v658
    %v1436 = vunpack.c.l.b16 %v659
    %v1437 = vunpack.c.h.b16 %v659
    %v1438 = vunpack.c.l.b16 %v660
    %v1439 = vunpack.c.h.b16 %v660
    %v1440 = vunpack.c.l.b16 %v661
    %v1441 = vunpack.c.h.b16 %v661
    %v1442 = vunpack.c.l.b16 %v662
    %v1443 = vunpack.c.h.b16 %v662
    %v1444 = vunpack.c.l.b16 %v663
    %v1445 = vunpack.c.h.b16 %v663
    %v1446 = vunpack.c.l.b16 %v664
    %v1447 = vunpack.c.h.b16 %v664
    %v1448 = vunpack.c.l.b16 %v665
    %v1449 = vunpack.c.h.b16 %v665
    %v1450 = vunpack.c.l.b16 %v666
    %v1451 = vunpack.c.h.b16 %v666
    %v1452 = vunpack.c.l.b16 %v667
    %v1453 = vunpack.c.h.b16 %v667
    %v1454 = vunpack.c.l.b16 %v668
    %v1455 = vunpack.c.h.b16 %v668
    %v1456 = vunpack.c.l.b16 %v669
    %v1457 = vunpack.c.h.b16 %v669
    %v1458 = vunpack.c.l.b16 %v670
    %v1459 = vunpack.c.h.b16 %v670
    %v1460 = vunpack.c.l.b16 %v671
    %v1461 = vunpack.c.h.b16 %v671
    %v1462 = vpack.c.b16 %v954, %v950
    %v1463 = vpack.c.b16 %v955, %v951
    %v1464 = vpack.c.b16 %v956, %v952
    %v1465 = vpack.c.b16 %v957, %v953
    %v1466 = vpack.c.b16 %v962, %v958
    %v1467 = vpack.c.b16 %v963, %v959
    %v1468 = vpack.c.b16 %v964, %v960
    %v1469 = vpack.c.b16 %v965, %v961
    %v1470 = vpack.c.b16 %v970, %v966
    %v1471 = vpack.c.b16 %v971, %v967
    %v1472 = vpack.c.b16 %v972, %v968
    %v1473 = vpack.c.b16 %v973, %v969
    %v1474 = vpack.c.b16 %v978, %v974
    %v1475 = vpack.c.b16 %v979, %v975
    %v1476 = vpack.c.b16 %v980, %v976
    %v1477 = vpack.c.b16 %v981, %v977
    %v1478 = vpack.c.b16 %v986, %v982
    %v1479 = vpack.c.b16 %v987, %v983
    %v1480 = vpack.c.b16 %v988, %v984
    %v1481 = vpack.c.b16 %v989, %v985
    %v1482 = vpack.c.b16 %v994, %v990
    %v1483 = vpack.c.b16 %v995, %v991
    %v1484 = vpack.c.b16 %v996, %v992
    %v1485 = vpack.c.b16 %v997, %v993
    %v1486 = vpack.c.b16 %v1002, %v998
    %v1487 = vpack.c.b16 %v1003, %v999
    %v1488 = vpack.c.b16 %v1004, %v1000
    %v1489 = vpack.c.b16 %v1005, %v1001
    %v1490 = vpack.c.b16 %v1010, %v1006
    %v1491 = vpack.c.b16 %v1011, %v1007
    %v1492 = vpack.c.b16 %v1012, %v1008
    %v1493 = vpack.c.b16 %v1013, %v1009
    %v1494 = vpack.c.b16 %v1018, %v1014
    %v1495 = vpack.c.b16 %v1019, %v1015
    %v1496 = vpack.c.b16 %v1020, %v1016
    %v1497 = vpack.c.b16 %v1021, %v1017
    %v1498 = vpack.c.b16 %v1026, %v1022
    %v1499 = vpack.c.b16 %v1027, %v1023
    %v1500 = vpack.c.b16 %v1028, %v1024
    %v1501 = vpack.c.b16 %v1029, %v1025
    %v1502 = vpack.c.b16 %v1034, %v1030
    %v1503 = vpack.c.b16 %v1035, %v1031
    %v1504 = vpack.c.b16 %v1036, %v1032
    %v1505 = vpack.c.b16 %v1037, %v1033
    %v1506 = vpack.c.b16 %v1042, %v1038
    %v1507 = vpack.c.b16 %v1043, %v1039
    %v1508 = vpack.c.b16 %v1044, %v1040
    %v1509 = vpack.c.b16 %v1045, %v1041
    %v1510 = vpack.c.b16 %v1050, %v1046
    %v1511 = vpack.c.b16 %v1051, %v1047
    %v1512 = vpack.c.b16 %v1052, %v1048
    %v1513 = vpack.c.b16 %v1053, %v1049
    %v1514 = vpack.c.b16 %v1058, %v1054
    %v1515 = vpack.c.b16 %v1059, %v1055
    %v1516 = vpack.c.b16 %v1060, %v1056
    %v1517 = vpack.c.b16 %v1061, %v1057
    %v1518 = vpack.c.b16 %v1066, %v1062
    %v1519 = vpack.c.b16 %v1067, %v1063
    %v1520 = vpack.c.b16 %v1068, %v1064
    %v1521 = vpack.c.b16 %v1069, %v1065
    %v1522 = vpack.c.b16 %v1074, %v1070
    %v1523 = vpack.c.b16 %v1075, %v1071
    %v1524 = vpack.c.b16 %v1076, %v1072
    %v1525 = vpack.c.b16 %v1077, %v1073
    %v1526 = vpack.c.b16 %v1082, %v1078
    %v1527 = vpack.c.b16 %v1083, %v1079
    %v1528 = vpack.c.b16 %v1084, %v1080
    %v1529 = vpack.c.b16 %v1085, %v1081
    %v1530 = vpack.c.b16 %v1090, %v1086
    %v1531 = vpack.c.b16 %v1091, %v1087
    %v1532 = vpack.c.b16 %v1092, %v1088
    %v1533 = vpack.c.b16 %v1093, %v1089
    %v1534 = vpack.c.b16 %v1098, %v1094
    %v1535 = vpack.c.b16 %v1099, %v1095
    %v1536 = vpack.c.b16 %v1100, %v1096
    %v1537 = vpack.c.b16 %v1101, %v1097
    %v1538 = vpack.c.b16 %v1106, %v1102
    %v1539 = vpack.c.b16 %v1107, %v1103
    %v1540 = vpack.c.b16 %v1108, %v1104
    %v1541 = vpack.c.b16 %v1109, %v1105
    %v1542 = vpack.c.b16 %v1114, %v1110
    %v1543 = vpack.c.b16 %v1115, %v1111
    %v1544 = vpack.c.b16 %v1116, %v1112
    %v1545 = vpack.c.b16 %v1117, %v1113
    %v1546 = vpack.c.b16 %v1122, %v1118
    %v1547 = vpack.c.b16 %v1123, %v1119
    %v1548 = vpack.c.b16 %v1124, %v1120
    %v1549 = vpack.c.b16 %v1125, %v1121
    %v1550 = vpack.c.b16 %v1130, %v1126
    %v1551 = vpack.c.b16 %v1131, %v1127
    %v1552 = vpack.c.b16 %v1132, %v1128
    %v1553 = vpack.c.b16 %v1133, %v1129
    %v1554 = vpack.c.b16 %v1138, %v1134
    %v1555 = vpack.c.b16 %v1139, %v1135
    %v1556 = vpack.c.b16 %v1140, %v1136
    %v1557 = vpack.c.b16 %v1141, %v1137
    %v1558 = vpack.c.b16 %v1146, %v1142
    %v1559 = vpack.c.b16 %v1147, %v1143
    %v1560 = vpack.c.b16 %v1148, %v1144
    %v1561 = vpack.c.b16 %v1149, %v1145
    %v1562 = vpack.c.b16 %v1154, %v1150
    %v1563 = vpack.c.b16 %v1155, %v1151
    %v1564 = vpack.c.b16 %v1156, %v1152
    %v1565 = vpack.c.b16 %v1157, %v1153
    %v1566 = vpack.c.b16 %v1162, %v1158
    %v1567 = vpack.c.b16 %v1163, %v1159
    %v1568 = vpack.c.b16 %v1164, %v1160
    %v1569 = vpack.c.b16 %v1165, %v1161
    %v1570 = vpack.c.b16 %v1170, %v1166
    %v1571 = vpack.c.b16 %v1171, %v1167
    %v1572 = vpack.c.b16 %v1172, %v1168
    %v1573 = vpack.c.b16 %v1173, %v1169
    %v1574 = vpack.c.b16 %v1178, %v1174
    %v1575 = vpack.c.b16 %v1179, %v1175
    %v1576 = vpack.c.b16 %v1180, %v1176
    %v1577 = vpack.c.b16 %v1181, %v1177
    %v1578 = vpack.c.b16 %v1186, %v1182
    %v1579 = vpack.c.b16 %v1187, %v1183
    %v1580 = vpack.c.b16 %v1188, %v1184
    %v1581 = vpack.c.b16 %v1189, %v1185
    %v1582 = vpack.c.b16 %v1194, %v1190
    %v1583 = vpack.c.b16 %v1195, %v1191
    %v1584 = vpack.c.b16 %v1196, %v1192
    %v1585 = vpack.c.b16 %v1197, %v1193
    %v1586 = vpack.c.b16 %v1202, %v1198
    %v1587 = vpack.c.b16 %v1203, %v1199
    %v1588 = vpack.c.b16 %v1204, %v1200
    %v1589 = vpack.c.b16 %v1205, %v1201
    %v1590 = vpack.c.b16 %v1210, %v1206
    %v1591 = vpack.c.b16 %v1211, %v1207
    %v1592 = vpack.c.b16 %v1212, %v1208
    %v1593 = vpack.c.b16 %v1213, %v1209
    %v1594 = vpack.c.b16 %v1218, %v1214
    %v1595 = vpack.c.b16 %v1219, %v1215
    %v1596 = vpack.c.b16 %v1220, %v1216
    %v1597 = vpack.c.b16 %v1221, %v1217
    %v1598 = vpack.c.b16 %v1226, %v1222
    %v1599 = vpack.c.b16 %v1227, %v1223
    %v1600 = vpack.c.b16 %v1228, %v1224
    %v1601 = vpack.c.b16 %v1229, %v1225
    %v1602 = vpack.c.b16 %v1234, %v1230
    %v1603 = vpack.c.b16 %v1235, %v1231
    %v1604 = vpack.c.b16 %v1236, %v1232
    %v1605 = vpack.c.b16 %v1237, %v1233
    %v1606 = vpack.c.b16 %v1242, %v1238
    %v1607 = vpack.c.b16 %v1243, %v1239
    %v1608 = vpack.c.b16 %v1244, %v1240
    %v1609 = vpack.c.b16 %v1245, %v1241
    %v1610 = vpack.c.b16 %v1250, %v1246
    %v1611 = vpack.c.b16 %v1251, %v1247
    %v1612 = vpack.c.b16 %v1252, %v1248
    %v1613 = vpack.c.b16 %v1253, %v1249
    %v1614 = vpack.c.b16 %v1258, %v1254
    %v1615 = vpack.c.b16 %v1259, %v1255
    %v1616 = vpack.c.b16 %v1260, %v1256
    %v1617 = vpack.c.b16 %v1261, %v1257
    %v1618 = vpack.c.b16 %v1266, %v1262
    %v1619 = vpack.c.b16 %v1267, %v1263
    %v1620 = vpack.c.b16 %v1268, %v1264
    %v1621 = vpack.c.b16 %v1269, %v1265
    %v1622 = vpack.c.b16 %v1274, %v1270
    %v1623 = vpack.c.b16 %v1275, %v1271
    %v1624 = vpack.c.b16 %v1276, %v1272
    %v1625 = vpack.c.b16 %v1277, %v1273
    %v1626 = vpack.c.b16 %v1282, %v1278
    %v1627 = vpack.c.b16 %v1283, %v1279
    %v1628 = vpack.c.b16 %v1284, %v1280
    %v1629 = vpack.c.b16 %v1285, %v1281
    %v1630 = vpack.c.b16 %v1290, %v1286
    %v1631 = vpack.c.b16 %v1291, %v1287
    %v1632 = vpack.c.b16 %v1292, %v1288
    %v1633 = vpack.c.b16 %v1293, %v1289
    %v1634 = vpack.c.b16 %v1298, %v1294
    %v1635 = vpack.c.b16 %v1299, %v1295
    %v1636 = vpack.c.b16 %v1300, %v1296
    %v1637 = vpack.c.b16 %v1301, %v1297
    %v1638 = vpack.c.b16 %v1306, %v1302
    %v1639 = vpack.c.b16 %v1307, %v1303
    %v1640 = vpack.c.b16 %v1308, %v1304
    %v1641 = vpack.c.b16 %v1309, %v1305
    %v1642 = vpack.c.b16 %v1314, %v1310
    %v1643 = vpack.c.b16 %v1315, %v1311
    %v1644 = vpack.c.b16 %v1316, %v1312
    %v1645 = vpack.c.b16 %v1317, %v1313
    %v1646 = vpack.c.b16 %v1322, %v1318
    %v1647 = vpack.c.b16 %v1323, %v1319
    %v1648 = vpack.c.b16 %v1324, %v1320
    %v1649 = vpack.c.b16 %v1325, %v1321
    %v1650 = vpack.c.b16 %v1330, %v1326
    %v1651 = vpack.c.b16 %v1331, %v1327
    %v1652 = vpack.c.b16 %v1332, %v1328
    %v1653 = vpack.c.b16 %v1333, %v1329
    %v1654 = vpack.c.b16 %v1338, %v1334
    %v1655 = vpack.c.b16 %v1339, %v1335
    %v1656 = vpack.c.b16 %v1340, %v1336
    %v1657 = vpack.c.b16 %v1341, %v1337
    %v1658 = vpack.c.b16 %v1346, %v1342
    %v1659 = vpack.c.b16 %v1347, %v1343
    %v1660 = vpack.c.b16 %v1348, %v1344
    %v1661 = vpack.c.b16 %v1349, %v1345
    %v1662 = vpack.c.b16 %v1354, %v1350
    %v1663 = vpack.c.b16 %v1355, %v1351
    %v1664 = vpack.c.b16 %v1356, %v1352
    %v1665 = vpack.c.b16 %v1357, %v1353
    %v1666 = vpack.c.b16 %v1362, %v1358
    %v1667 = vpack.c.b16 %v1363, %v1359
    %v1668 = vpack.c.b16 %v1364, %v1360
    %v1669 = vpack.c.b16 %v1365, %v1361
    %v1670 = vpack.c.b16 %v1370, %v1366
    %v1671 = vpack.c.b16 %v1371, %v1367
    %v1672 = vpack.c.b16 %v1372, %v1368
    %v1673 = vpack.c.b16 %v1373, %v1369
    %v1674 = vpack.c.b16 %v1378, %v1374
    %v1675 = vpack.c.b16 %v1379, %v1375
    %v1676 = vpack.c.b16 %v1380, %v1376
    %v1677 = vpack.c.b16 %v1381, %v1377
    %v1678 = vpack.c.b16 %v1386, %v1382
    %v1679 = vpack.c.b16 %v1387, %v1383
    %v1680 = vpack.c.b16 %v1388, %v1384
    %v1681 = vpack.c.b16 %v1389, %v1385
    %v1682 = vpack.c.b16 %v1394, %v1390
    %v1683 = vpack.c.b16 %v1395, %v1391
    %v1684 = vpack.c.b16 %v1396, %v1392
    %v1685 = vpack.c.b16 %v1397, %v1393
    %v1686 = vpack.c.b16 %v1402, %v1398
    %v1687 = vpack.c.b16 %v1403, %v1399
    %v1688 = vpack.c.b16 %v1404, %v1400
    %v1689 = vpack.c.b16 %v1405, %v1401
    %v1690 = vpack.c.b16 %v1410, %v1406
    %v1691 = vpack.c.b16 %v1411, %v1407
    %v1692 = vpack.c.b16 %v1412, %v1408
    %v1693 = vpack.c.b16 %v1413, %v1409
    %v1694 = vpack.c.b16 %v1418, %v1414
    %v1695 = vpack.c.b16 %v1419, %v1415
    %v1696 = vpack.c.b16 %v1420, %v1416
    %v1697 = vpack.c.b16 %v1421, %v1417
    %v1698 = vpack.c.b16 %v1426, %v1422
    %v1699 = vpack.c.b16 %v1427, %v1423
    %v1700 = vpack.c.b16 %v1428, %v1424
    %v1701 = vpack.c.b16 %v1429, %v1425
    %v1702 = vpack.c.b16 %v1434, %v1430
    %v1703 = vpack.c.b16 %v1435, %v1431
    %v1704 = vpack.c.b16 %v1436, %v1432
    %v1705 = vpack.c.b16 %v1437, %v1433
    %v1706 = vpack.c.b16 %v1442, %v1438
    %v1707 = vpack.c.b16 %v1443, %v1439
    %v1708 = vpack.c.b16 %v1444, %v1440
    %v1709 = vpack.c.b16 %v1445, %v1441
    %v1710 = vpack.c.b16 %v1450, %v1446
    %v1711 = vpack.c.b16 %v1451, %v1447
    %v1712 = vpack.c.b16 %v1452, %v1448
    %v1713 = vpack.c.b16 %v1453, %v1449
    %v1714 = vpack.c.b16 %v1458, %v1454
    %v1715 = vpack.c.b16 %v1459, %v1455
    %v1716 = vpack.c.b16 %v1460, %v1456
    %v1717 = vpack.c.b16 %v1461, %v1457
    %1974 = vmatprep.subr.bf16.mxu0 %v1463
    %1975 = vmatpush1.bf16.msra.mxu0 %v1462
    %1976 = vmatprep.subr.bf16.mxu0 %v1467
    %1977 = vmatpush1.bf16.msra.mxu0 %v1466
    %1978 = vmatprep.subr.bf16.mxu0 %v1471
    %1979 = vmatpush1.bf16.msra.mxu0 %v1470
    %1980 = vmatprep.subr.bf16.mxu0 %v1475
    %1981 = vmatpush1.bf16.msra.mxu0 %v1474
    %1982 = vmatprep.subr.bf16.mxu0 %v1479
    %1983 = vmatpush1.bf16.msra.mxu0 %v1478
    %1984 = vmatprep.subr.bf16.mxu0 %v1483
    %1985 = vmatpush1.bf16.msra.mxu0 %v1482
    %1986 = vmatprep.subr.bf16.mxu0 %v1487
    %1987 = vmatpush1.bf16.msra.mxu0 %v1486
    %1988 = vmatprep.subr.bf16.mxu0 %v1491
    %1989 = vmatpush1.bf16.msra.mxu0 %v1490
    %1990 = vmatprep.subr.bf16.mxu0 %v1495
    %1991 = vmatpush1.bf16.msra.mxu0 %v1494
    %1992 = vmatprep.subr.bf16.mxu0 %v1499
    %1993 = vmatpush1.bf16.msra.mxu0 %v1498
    %1994 = vmatprep.subr.bf16.mxu0 %v1503
    %1995 = vmatpush1.bf16.msra.mxu0 %v1502
    %1996 = vmatprep.subr.bf16.mxu0 %v1507
    %1997 = vmatpush1.bf16.msra.mxu0 %v1506
    %1998 = vmatprep.subr.bf16.mxu0 %v1511
    %1999 = vmatpush1.bf16.msra.mxu0 %v1510
    %2000 = vmatprep.subr.bf16.mxu0 %v1515
    %2001 = vmatpush1.bf16.msra.mxu0 %v1514
    %2002 = vmatprep.subr.bf16.mxu0 %v1519
    %2003 = vmatpush1.bf16.msra.mxu0 %v1518
    %2004 = vmatprep.subr.bf16.mxu0 %v1523
    %2005 = vmatpush1.bf16.msra.mxu0 %v1522
    %2006 = vmatprep.mubr.bf16.mxu0 %v409
    %2007 = vmatmul.mubr.bf16.gmra.mrb[0].mxu0 %v408
    %v2008 = vpop.f32.mrb[0].mxu0
    %v2009 = vadd.f32 %v677, %v2008
    %v2010 = vpop.f32.mrb[0].mxu0
    %v2011 = vadd.f32 %v681, %v2010
    %v2012 = vpop.f32.mrb[0].mxu0
    %v2013 = vpop.f32.mrb[0].mxu0
    %2014 = vdwg.mxu0
    %2015 = vmatprep.subr.bf16.mxu0 %v1527
    %2016 = vmatpush1.bf16.msra.mxu0 %v1526
    %2017 = vmatprep.subr.bf16.mxu0 %v1531
    %2018 = vmatpush1.bf16.msra.mxu0 %v1530
    %2019 = vmatprep.subr.bf16.mxu0 %v1535
    %2020 = vmatpush1.bf16.msra.mxu0 %v1534
    %2021 = vmatprep.subr.bf16.mxu0 %v1539
    %2022 = vmatpush1.bf16.msra.mxu0 %v1538
    %2023 = vmatprep.subr.bf16.mxu0 %v1543
    %2024 = vmatpush1.bf16.msra.mxu0 %v1542
    %2025 = vmatprep.subr.bf16.mxu0 %v1547
    %2026 = vmatpush1.bf16.msra.mxu0 %v1546
    %2027 = vmatprep.subr.bf16.mxu0 %v1551
    %2028 = vmatpush1.bf16.msra.mxu0 %v1550
    %2029 = vmatprep.subr.bf16.mxu0 %v1555
    %2030 = vmatpush1.bf16.msra.mxu0 %v1554
    %2031 = vmatprep.subr.bf16.mxu0 %v1559
    %2032 = vmatpush1.bf16.msra.mxu0 %v1558
    %2033 = vmatprep.subr.bf16.mxu0 %v1563
    %2034 = vmatpush1.bf16.msra.mxu0 %v1562
    %2035 = vmatprep.subr.bf16.mxu0 %v1567
    %2036 = vmatpush1.bf16.msra.mxu0 %v1566
    %2037 = vmatprep.subr.bf16.mxu0 %v1571
    %2038 = vmatpush1.bf16.msra.mxu0 %v1570
    %2039 = vmatprep.subr.bf16.mxu0 %v1575
    %2040 = vmatpush1.bf16.msra.mxu0 %v1574
    %2041 = vmatprep.subr.bf16.mxu0 %v1579
    %2042 = vmatpush1.bf16.msra.mxu0 %v1578
    %2043 = vmatprep.subr.bf16.mxu0 %v1583
    %2044 = vmatpush1.bf16.msra.mxu0 %v1582
    %2045 = vmatprep.subr.bf16.mxu0 %v1587
    %2046 = vmatpush1.bf16.msra.mxu0 %v1586
    %2047 = vmatprep.mubr.bf16.mxu0 %v411
    %2048 = vmatmul.mubr.bf16.gmra.mrb[0].mxu0 %v410
    %v2049 = vpop.f32.mrb[0].mxu0
    %v2050 = vadd.f32 %v2009, %v2049
    %v2051 = vpop.f32.mrb[0].mxu0
    %v2052 = vadd.f32 %v2011, %v2051
    %v2053 = vpop.f32.mrb[0].mxu0
    %v2054 = vpop.f32.mrb[0].mxu0
    %2055 = vdwg.mxu0
    %2056 = vmatprep.subr.bf16.mxu0 %v1591
    %2057 = vmatpush1.bf16.msra.mxu0 %v1590
    %2058 = vmatprep.subr.bf16.mxu0 %v1595
    %2059 = vmatpush1.bf16.msra.mxu0 %v1594
    %2060 = vmatprep.subr.bf16.mxu0 %v1599
    %2061 = vmatpush1.bf16.msra.mxu0 %v1598
    %2062 = vmatprep.subr.bf16.mxu0 %v1603
    %2063 = vmatpush1.bf16.msra.mxu0 %v1602
    %2064 = vmatprep.subr.bf16.mxu0 %v1607
    %2065 = vmatpush1.bf16.msra.mxu0 %v1606
    %2066 = vmatprep.subr.bf16.mxu0 %v1611
    %2067 = vmatpush1.bf16.msra.mxu0 %v1610
    %2068 = vmatprep.subr.bf16.mxu0 %v1615
    %2069 = vmatpush1.bf16.msra.mxu0 %v1614
    %2070 = vmatprep.subr.bf16.mxu0 %v1619
    %2071 = vmatpush1.bf16.msra.mxu0 %v1618
    %2072 = vmatprep.subr.bf16.mxu0 %v1623
    %2073 = vmatpush1.bf16.msra.mxu0 %v1622
    %2074 = vmatprep.subr.bf16.mxu0 %v1627
    %2075 = vmatpush1.bf16.msra.mxu0 %v1626
    %2076 = vmatprep.subr.bf16.mxu0 %v1631
    %2077 = vmatpush1.bf16.msra.mxu0 %v1630
    %2078 = vmatprep.subr.bf16.mxu0 %v1635
    %2079 = vmatpush1.bf16.msra.mxu0 %v1634
    %2080 = vmatprep.subr.bf16.mxu0 %v1639
    %2081 = vmatpush1.bf16.msra.mxu0 %v1638
    %2082 = vmatprep.subr.bf16.mxu0 %v1643
    %2083 = vmatpush1.bf16.msra.mxu0 %v1642
    %2084 = vmatprep.subr.bf16.mxu0 %v1647
    %2085 = vmatpush1.bf16.msra.mxu0 %v1646
    %2086 = vmatprep.subr.bf16.mxu0 %v1651
    %2087 = vmatpush1.bf16.msra.mxu0 %v1650
    %2088 = vmatprep.mubr.bf16.mxu0 %v413
    %2089 = vmatmul.mubr.bf16.gmra.mrb[0].mxu0 %v412
    %v2090 = vpop.f32.mrb[0].mxu0
    %v2091 = vadd.f32 %v2050, %v2090
    %v2092 = vpop.f32.mrb[0].mxu0
    %v2093 = vadd.f32 %v2052, %v2092
    %v2094 = vpop.f32.mrb[0].mxu0
    %v2095 = vpop.f32.mrb[0].mxu0
    %2096 = vdwg.mxu0
    %2097 = vmatprep.subr.bf16.mxu0 %v1655
    %2098 = vmatpush1.bf16.msra.mxu0 %v1654
    %2099 = vmatprep.subr.bf16.mxu0 %v1659
    %2100 = vmatpush1.bf16.msra.mxu0 %v1658
    %2101 = vmatprep.subr.bf16.mxu0 %v1663
    %2102 = vmatpush1.bf16.msra.mxu0 %v1662
    %2103 = vmatprep.subr.bf16.mxu0 %v1667
    %2104 = vmatpush1.bf16.msra.mxu0 %v1666
    %2105 = vmatprep.subr.bf16.mxu0 %v1671
    %2106 = vmatpush1.bf16.msra.mxu0 %v1670
    %2107 = vmatprep.subr.bf16.mxu0 %v1675
    %2108 = vmatpush1.bf16.msra.mxu0 %v1674
    %2109 = vmatprep.subr.bf16.mxu0 %v1679
    %2110 = vmatpush1.bf16.msra.mxu0 %v1678
    %2111 = vmatprep.subr.bf16.mxu0 %v1683
    %2112 = vmatpush1.bf16.msra.mxu0 %v1682
    %2113 = vmatprep.subr.bf16.mxu0 %v1687
    %2114 = vmatpush1.bf16.msra.mxu0 %v1686
    %2115 = vmatprep.subr.bf16.mxu0 %v1691
    %2116 = vmatpush1.bf16.msra.mxu0 %v1690
    %2117 = vmatprep.subr.bf16.mxu0 %v1695
    %2118 = vmatpush1.bf16.msra.mxu0 %v1694
    %2119 = vmatprep.subr.bf16.mxu0 %v1699
    %2120 = vmatpush1.bf16.msra.mxu0 %v1698
    %2121 = vmatprep.subr.bf16.mxu0 %v1703
    %2122 = vmatpush1.bf16.msra.mxu0 %v1702
    %2123 = vmatprep.subr.bf16.mxu0 %v1707
    %2124 = vmatpush1.bf16.msra.mxu0 %v1706
    %2125 = vmatprep.subr.bf16.mxu0 %v1711
    %2126 = vmatpush1.bf16.msra.mxu0 %v1710
    %2127 = vmatprep.subr.bf16.mxu0 %v1715
    %2128 = vmatpush1.bf16.msra.mxu0 %v1714
    %2129 = vmatprep.mubr.bf16.mxu0 %v415
    %2130 = vmatmul.mubr.bf16.gmra.mrb[0].mxu0 %v414
    %v2131 = vpop.f32.mrb[0].mxu0
    %v2132 = vadd.f32 %v2091, %v2131
    %v2133 = vpop.f32.mrb[0].mxu0
    %v2134 = vadd.f32 %v2093, %v2133
    %v2135 = vpop.f32.mrb[0].mxu0
    %v2136 = vpop.f32.mrb[0].mxu0
    %2137 = vdwg.mxu0
    %2138 = vmatprep.subr.bf16.mxu0 %v1465
    %2139 = vmatpush1.bf16.msra.mxu0 %v1464
    %2140 = vmatprep.subr.bf16.mxu0 %v1469
    %2141 = vmatpush1.bf16.msra.mxu0 %v1468
    %2142 = vmatprep.subr.bf16.mxu0 %v1473
    %2143 = vmatpush1.bf16.msra.mxu0 %v1472
    %2144 = vmatprep.subr.bf16.mxu0 %v1477
    %2145 = vmatpush1.bf16.msra.mxu0 %v1476
    %2146 = vmatprep.subr.bf16.mxu0 %v1481
    %2147 = vmatpush1.bf16.msra.mxu0 %v1480
    %2148 = vmatprep.subr.bf16.mxu0 %v1485
    %2149 = vmatpush1.bf16.msra.mxu0 %v1484
    %2150 = vmatprep.subr.bf16.mxu0 %v1489
    %2151 = vmatpush1.bf16.msra.mxu0 %v1488
    %2152 = vmatprep.subr.bf16.mxu0 %v1493
    %2153 = vmatpush1.bf16.msra.mxu0 %v1492
    %2154 = vmatprep.subr.bf16.mxu0 %v1497
    %2155 = vmatpush1.bf16.msra.mxu0 %v1496
    %2156 = vmatprep.subr.bf16.mxu0 %v1501
    %2157 = vmatpush1.bf16.msra.mxu0 %v1500
    %2158 = vmatprep.subr.bf16.mxu0 %v1505
    %2159 = vmatpush1.bf16.msra.mxu0 %v1504
    %2160 = vmatprep.subr.bf16.mxu0 %v1509
    %2161 = vmatpush1.bf16.msra.mxu0 %v1508
    %2162 = vmatprep.subr.bf16.mxu0 %v1513
    %2163 = vmatpush1.bf16.msra.mxu0 %v1512
    %2164 = vmatprep.subr.bf16.mxu0 %v1517
    %2165 = vmatpush1.bf16.msra.mxu0 %v1516
    %2166 = vmatprep.subr.bf16.mxu0 %v1521
    %2167 = vmatpush1.bf16.msra.mxu0 %v1520
    %2168 = vmatprep.subr.bf16.mxu0 %v1525
    %2169 = vmatpush1.bf16.msra.mxu0 %v1524
    %2170 = vmatprep.mubr.bf16.mxu0 %v409
    %2171 = vmatmul.mubr.bf16.gmra.mrb[0].mxu0 %v408
    %v2172 = vpop.f32.mrb[0].mxu0
    %v2173 = vadd.f32 %v685, %v2172
    %v2174 = vpop.f32.mrb[0].mxu0
    %v2175 = vadd.f32 %v689, %v2174
    %v2176 = vpop.f32.mrb[0].mxu0
    %v2177 = vpop.f32.mrb[0].mxu0
    %2178 = vdwg.mxu0
    %2179 = vmatprep.subr.bf16.mxu0 %v1529
    %2180 = vmatpush1.bf16.msra.mxu0 %v1528
    %2181 = vmatprep.subr.bf16.mxu0 %v1533
    %2182 = vmatpush1.bf16.msra.mxu0 %v1532
    %2183 = vmatprep.subr.bf16.mxu0 %v1537
    %2184 = vmatpush1.bf16.msra.mxu0 %v1536
    %2185 = vmatprep.subr.bf16.mxu0 %v1541
    %2186 = vmatpush1.bf16.msra.mxu0 %v1540
    %2187 = vmatprep.subr.bf16.mxu0 %v1545
    %2188 = vmatpush1.bf16.msra.mxu0 %v1544
    %2189 = vmatprep.subr.bf16.mxu0 %v1549
    %2190 = vmatpush1.bf16.msra.mxu0 %v1548
    %2191 = vmatprep.subr.bf16.mxu0 %v1553
    %2192 = vmatpush1.bf16.msra.mxu0 %v1552
    %2193 = vmatprep.subr.bf16.mxu0 %v1557
    %2194 = vmatpush1.bf16.msra.mxu0 %v1556
    %2195 = vmatprep.subr.bf16.mxu0 %v1561
    %2196 = vmatpush1.bf16.msra.mxu0 %v1560
    %2197 = vmatprep.subr.bf16.mxu0 %v1565
    %2198 = vmatpush1.bf16.msra.mxu0 %v1564
    %2199 = vmatprep.subr.bf16.mxu0 %v1569
    %2200 = vmatpush1.bf16.msra.mxu0 %v1568
    %2201 = vmatprep.subr.bf16.mxu0 %v1573
    %2202 = vmatpush1.bf16.msra.mxu0 %v1572
    %2203 = vmatprep.subr.bf16.mxu0 %v1577
    %2204 = vmatpush1.bf16.msra.mxu0 %v1576
    %2205 = vmatprep.subr.bf16.mxu0 %v1581
    %2206 = vmatpush1.bf16.msra.mxu0 %v1580
    %2207 = vmatprep.subr.bf16.mxu0 %v1585
    %2208 = vmatpush1.bf16.msra.mxu0 %v1584
    %2209 = vmatprep.subr.bf16.mxu0 %v1589
    %2210 = vmatpush1.bf16.msra.mxu0 %v1588
    %2211 = vmatprep.mubr.bf16.mxu0 %v411
    %2212 = vmatmul.mubr.bf16.gmra.mrb[0].mxu0 %v410
    %v2213 = vpop.f32.mrb[0].mxu0
    %v2214 = vadd.f32 %v2173, %v2213
    %v2215 = vpop.f32.mrb[0].mxu0
    %v2216 = vadd.f32 %v2175, %v2215
    %v2217 = vpop.f32.mrb[0].mxu0
    %v2218 = vpop.f32.mrb[0].mxu0
    %2219 = vdwg.mxu0
    %2220 = vmatprep.subr.bf16.mxu0 %v1593
    %2221 = vmatpush1.bf16.msra.mxu0 %v1592
    %2222 = vmatprep.subr.bf16.mxu0 %v1597
    %2223 = vmatpush1.bf16.msra.mxu0 %v1596
    %2224 = vmatprep.subr.bf16.mxu0 %v1601
    %2225 = vmatpush1.bf16.msra.mxu0 %v1600
    %2226 = vmatprep.subr.bf16.mxu0 %v1605
    %2227 = vmatpush1.bf16.msra.mxu0 %v1604
    %2228 = vmatprep.subr.bf16.mxu0 %v1609
    %2229 = vmatpush1.bf16.msra.mxu0 %v1608
    %2230 = vmatprep.subr.bf16.mxu0 %v1613
    %2231 = vmatpush1.bf16.msra.mxu0 %v1612
    %2232 = vmatprep.subr.bf16.mxu0 %v1617
    %2233 = vmatpush1.bf16.msra.mxu0 %v1616
    %2234 = vmatprep.subr.bf16.mxu0 %v1621
    %2235 = vmatpush1.bf16.msra.mxu0 %v1620
    %2236 = vmatprep.subr.bf16.mxu0 %v1625
    %2237 = vmatpush1.bf16.msra.mxu0 %v1624
    %2238 = vmatprep.subr.bf16.mxu0 %v1629
    %2239 = vmatpush1.bf16.msra.mxu0 %v1628
    %2240 = vmatprep.subr.bf16.mxu0 %v1633
    %2241 = vmatpush1.bf16.msra.mxu0 %v1632
    %2242 = vmatprep.subr.bf16.mxu0 %v1637
    %2243 = vmatpush1.bf16.msra.mxu0 %v1636
    %2244 = vmatprep.subr.bf16.mxu0 %v1641
    %2245 = vmatpush1.bf16.msra.mxu0 %v1640
    %2246 = vmatprep.subr.bf16.mxu0 %v1645
    %2247 = vmatpush1.bf16.msra.mxu0 %v1644
    %2248 = vmatprep.subr.bf16.mxu0 %v1649
    %2249 = vmatpush1.bf16.msra.mxu0 %v1648
    %2250 = vmatprep.subr.bf16.mxu0 %v1653
    %2251 = vmatpush1.bf16.msra.mxu0 %v1652
    %2252 = vmatprep.mubr.bf16.mxu0 %v413
    %2253 = vmatmul.mubr.bf16.gmra.mrb[0].mxu0 %v412
    %v2254 = vpop.f32.mrb[0].mxu0
    %v2255 = vadd.f32 %v2214, %v2254
    %v2256 = vpop.f32.mrb[0].mxu0
    %v2257 = vadd.f32 %v2216, %v2256
    %v2258 = vpop.f32.mrb[0].mxu0
    %v2259 = vpop.f32.mrb[0].mxu0
    %2260 = vdwg.mxu0
    %2261 = vmatprep.subr.bf16.mxu0 %v1657
    %2262 = vmatpush1.bf16.msra.mxu0 %v1656
    %2263 = vmatprep.subr.bf16.mxu0 %v1661
    %2264 = vmatpush1.bf16.msra.mxu0 %v1660
    %2265 = vmatprep.subr.bf16.mxu0 %v1665
    %2266 = vmatpush1.bf16.msra.mxu0 %v1664
    %2267 = vmatprep.subr.bf16.mxu0 %v1669
    %2268 = vmatpush1.bf16.msra.mxu0 %v1668
    %2269 = vmatprep.subr.bf16.mxu0 %v1673
    %2270 = vmatpush1.bf16.msra.mxu0 %v1672
    %2271 = vmatprep.subr.bf16.mxu0 %v1677
    %2272 = vmatpush1.bf16.msra.mxu0 %v1676
    %2273 = vmatprep.subr.bf16.mxu0 %v1681
    %2274 = vmatpush1.bf16.msra.mxu0 %v1680
    %2275 = vmatprep.subr.bf16.mxu0 %v1685
    %2276 = vmatpush1.bf16.msra.mxu0 %v1684
    %2277 = vmatprep.subr.bf16.mxu0 %v1689
    %2278 = vmatpush1.bf16.msra.mxu0 %v1688
    %2279 = vmatprep.subr.bf16.mxu0 %v1693
    %2280 = vmatpush1.bf16.msra.mxu0 %v1692
    %2281 = vmatprep.subr.bf16.mxu0 %v1697
    %2282 = vmatpush1.bf16.msra.mxu0 %v1696
    %2283 = vmatprep.subr.bf16.mxu0 %v1701
    %2284 = vmatpush1.bf16.msra.mxu0 %v1700
    %2285 = vmatprep.subr.bf16.mxu0 %v1705
    %2286 = vmatpush1.bf16.msra.mxu0 %v1704
    %2287 = vmatprep.subr.bf16.mxu0 %v1709
    %2288 = vmatpush1.bf16.msra.mxu0 %v1708
    %2289 = vmatprep.subr.bf16.mxu0 %v1713
    %2290 = vmatpush1.bf16.msra.mxu0 %v1712
    %2291 = vmatprep.subr.bf16.mxu0 %v1717
    %2292 = vmatpush1.bf16.msra.mxu0 %v1716
    %2293 = vmatprep.mubr.bf16.mxu0 %v415
    %2294 = vmatmul.mubr.bf16.gmra.mrb[0].mxu0 %v414
    %v2295 = vpop.f32.mrb[0].mxu0
    %v2296 = vadd.f32 %v2255, %v2295
    %v2297 = vpop.f32.mrb[0].mxu0
    %v2298 = vadd.f32 %v2257, %v2297
    %v2299 = vpop.f32.mrb[0].mxu0
    %v2300 = vpop.f32.mrb[0].mxu0
    %2301 = vdwg.mxu0
    %v2302 = vtanh.pop %v2132
    %v2303 = vtanh.pop %v2134
    %v2304 = vtanh.pop %v2296
    %v2305 = vtanh.pop %v2298
    %v2306 = vpack.c.bf16 %v2302, %v2302
    %v2307 = vpack.c.bf16 %v2303, %v2303
    %v2308 = vpack.c.bf16 %v2304, %v2304
    %v2309 = vpack.c.bf16 %v2305, %v2305
    %v2310 = vld [vmem:[#allocation10] sm:$0xf]
    %v2311 = vld [vmem:[#allocation10 + $0x4] sm:$0xf]
    %v2312 = vld [vmem:[#allocation10 + $0x8] sm:$0xf]
    %v2313 = vld [vmem:[#allocation10 + $0xc] sm:$0xf]
    %v2314 = vld [vmem:[#allocation10 + $0x10] sm:$0xf]
    %v2315 = vld [vmem:[#allocation10 + $0x14] sm:$0xf]
    %v2316 = vld [vmem:[#allocation10 + $0x18] sm:$0xf]
    %v2317 = vld [vmem:[#allocation10 + $0x1c] sm:$0xf]
    %v2318 = vld [vmem:[#allocation10 + $0x20] sm:$0xf]
    %v2319 = vld [vmem:[#allocation10 + $0x24] sm:$0xf]
    %v2320 = vld [vmem:[#allocation10 + $0x28] sm:$0xf]
    %v2321 = vld [vmem:[#allocation10 + $0x2c] sm:$0xf]
    %v2322 = vld [vmem:[#allocation10 + $0x30] sm:$0xf]
    %v2323 = vld [vmem:[#allocation10 + $0x34] sm:$0xf]
    %v2324 = vld [vmem:[#allocation10 + $0x38] sm:$0xf]
    %v2325 = vld [vmem:[#allocation10 + $0x3c] sm:$0xf]
    %v2326 = vld [vmem:[#allocation10 + $0x40] sm:$0xf]
    %v2327 = vld [vmem:[#allocation10 + $0x44] sm:$0xf]
    %v2328 = vld [vmem:[#allocation10 + $0x48] sm:$0xf]
    %v2329 = vld [vmem:[#allocation10 + $0x4c] sm:$0xf]
    %v2330 = vld [vmem:[#allocation10 + $0x50] sm:$0xf]
    %v2331 = vld [vmem:[#allocation10 + $0x54] sm:$0xf]
    %v2332 = vld [vmem:[#allocation10 + $0x58] sm:$0xf]
    %v2333 = vld [vmem:[#allocation10 + $0x5c] sm:$0xf]
    %v2334 = vld [vmem:[#allocation10 + $0x60] sm:$0xf]
    %v2335 = vld [vmem:[#allocation10 + $0x64] sm:$0xf]
    %v2336 = vld [vmem:[#allocation10 + $0x68] sm:$0xf]
    %v2337 = vld [vmem:[#allocation10 + $0x6c] sm:$0xf]
    %v2338 = vld [vmem:[#allocation10 + $0x70] sm:$0xf]
    %v2339 = vld [vmem:[#allocation10 + $0x74] sm:$0xf]
    %v2340 = vld [vmem:[#allocation10 + $0x78] sm:$0xf]
    %v2341 = vld [vmem:[#allocation10 + $0x7c] sm:$0xf]
    %v2342 = vld [vmem:[#allocation10 + $0x80] sm:$0xf]
    %v2343 = vld [vmem:[#allocation10 + $0x84] sm:$0xf]
    %v2344 = vld [vmem:[#allocation10 + $0x88] sm:$0xf]
    %v2345 = vld [vmem:[#allocation10 + $0x8c] sm:$0xf]
    %v2346 = vld [vmem:[#allocation10 + $0x90] sm:$0xf]
    %v2347 = vld [vmem:[#allocation10 + $0x94] sm:$0xf]
    %v2348 = vld [vmem:[#allocation10 + $0x98] sm:$0xf]
    %v2349 = vld [vmem:[#allocation10 + $0x9c] sm:$0xf]
    %v2350 = vld [vmem:[#allocation10 + $0xa0] sm:$0xf]
    %v2351 = vld [vmem:[#allocation10 + $0xa4] sm:$0xf]
    %v2352 = vld [vmem:[#allocation10 + $0xa8] sm:$0xf]
    %v2353 = vld [vmem:[#allocation10 + $0xac] sm:$0xf]
    %v2354 = vld [vmem:[#allocation10 + $0xb0] sm:$0xf]
    %v2355 = vld [vmem:[#allocation10 + $0xb4] sm:$0xf]
    %v2356 = vld [vmem:[#allocation10 + $0xb8] sm:$0xf]
    %v2357 = vld [vmem:[#allocation10 + $0xbc] sm:$0xf]
    %v2358 = vld [vmem:[#allocation10 + $0xc0] sm:$0xf]
    %v2359 = vld [vmem:[#allocation10 + $0xc4] sm:$0xf]
    %v2360 = vld [vmem:[#allocation10 + $0xc8] sm:$0xf]
    %v2361 = vld [vmem:[#allocation10 + $0xcc] sm:$0xf]
    %v2362 = vld [vmem:[#allocation10 + $0xd0] sm:$0xf]
    %v2363 = vld [vmem:[#allocation10 + $0xd4] sm:$0xf]
    %v2364 = vld [vmem:[#allocation10 + $0xd8] sm:$0xf]
    %v2365 = vld [vmem:[#allocation10 + $0xdc] sm:$0xf]
    %v2366 = vld [vmem:[#allocation10 + $0xe0] sm:$0xf]
    %v2367 = vld [vmem:[#allocation10 + $0xe4] sm:$0xf]
    %v2368 = vld [vmem:[#allocation10 + $0xe8] sm:$0xf]
    %v2369 = vld [vmem:[#allocation10 + $0xec] sm:$0xf]
    %v2370 = vld [vmem:[#allocation10 + $0xf0] sm:$0xf]
    %v2371 = vld [vmem:[#allocation10 + $0xf4] sm:$0xf]
    %v2372 = vld [vmem:[#allocation10 + $0xf8] sm:$0xf]
    %v2373 = vld [vmem:[#allocation10 + $0xfc] sm:$0xf]
    %v2374 = vld [vmem:[%s6] sm:$0x1]
    %v2376 = vlaneseq
    %v2377 = vshrl.u32 %v2376, 7
    %v2378 = vsub.s32 0, %v2377
    %v2379 = vrot.slane %v2374, %v2378
    %v2445 = vunpack.c.l.b16 %v2310
    %v2446 = vunpack.c.l.b16 %v2311
    %v2447 = vunpack.c.l.b16 %v2312
    %v2448 = vunpack.c.l.b16 %v2313
    %v2449 = vunpack.c.l.b16 %v2314
    %v2450 = vunpack.c.l.b16 %v2315
    %v2451 = vunpack.c.l.b16 %v2316
    %v2452 = vunpack.c.l.b16 %v2317
    %v2453 = vunpack.c.l.b16 %v2318
    %v2454 = vunpack.c.l.b16 %v2319
    %v2455 = vunpack.c.l.b16 %v2320
    %v2456 = vunpack.c.l.b16 %v2321
    %v2457 = vunpack.c.l.b16 %v2322
    %v2458 = vunpack.c.l.b16 %v2323
    %v2459 = vunpack.c.l.b16 %v2324
    %v2460 = vunpack.c.l.b16 %v2325
    %v2461 = vunpack.c.l.b16 %v2326
    %v2462 = vunpack.c.l.b16 %v2327
    %v2463 = vunpack.c.l.b16 %v2328
    %v2464 = vunpack.c.l.b16 %v2329
    %v2465 = vunpack.c.l.b16 %v2330
    %v2466 = vunpack.c.l.b16 %v2331
    %v2467 = vunpack.c.l.b16 %v2332
    %v2468 = vunpack.c.l.b16 %v2333
    %v2469 = vunpack.c.l.b16 %v2334
    %v2470 = vunpack.c.l.b16 %v2335
    %v2471 = vunpack.c.l.b16 %v2336
    %v2472 = vunpack.c.l.b16 %v2337
    %v2473 = vunpack.c.l.b16 %v2338
    %v2474 = vunpack.c.l.b16 %v2339
    %v2475 = vunpack.c.l.b16 %v2340
    %v2476 = vunpack.c.l.b16 %v2341
    %v2477 = vunpack.c.l.b16 %v2342
    %v2478 = vunpack.c.l.b16 %v2343
    %v2479 = vunpack.c.l.b16 %v2344
    %v2480 = vunpack.c.l.b16 %v2345
    %v2481 = vunpack.c.l.b16 %v2346
    %v2482 = vunpack.c.l.b16 %v2347
    %v2483 = vunpack.c.l.b16 %v2348
    %v2484 = vunpack.c.l.b16 %v2349
    %v2485 = vunpack.c.l.b16 %v2350
    %v2486 = vunpack.c.l.b16 %v2351
    %v2487 = vunpack.c.l.b16 %v2352
    %v2488 = vunpack.c.l.b16 %v2353
    %v2489 = vunpack.c.l.b16 %v2354
    %v2490 = vunpack.c.l.b16 %v2355
    %v2491 = vunpack.c.l.b16 %v2356
    %v2492 = vunpack.c.l.b16 %v2357
    %v2493 = vunpack.c.l.b16 %v2358
    %v2494 = vunpack.c.l.b16 %v2359
    %v2495 = vunpack.c.l.b16 %v2360
    %v2496 = vunpack.c.l.b16 %v2361
    %v2497 = vunpack.c.l.b16 %v2362
    %v2498 = vunpack.c.l.b16 %v2363
    %v2499 = vunpack.c.l.b16 %v2364
    %v2500 = vunpack.c.l.b16 %v2365
    %v2501 = vunpack.c.l.b16 %v2366
    %v2502 = vunpack.c.l.b16 %v2367
    %v2503 = vunpack.c.l.b16 %v2368
    %v2504 = vunpack.c.l.b16 %v2369
    %v2505 = vunpack.c.l.b16 %v2370
    %v2506 = vunpack.c.l.b16 %v2371
    %v2507 = vunpack.c.l.b16 %v2372
    %v2508 = vunpack.c.l.b16 %v2373
    %v2509 = vpack.c.b16 %v2446, %v2445
    %v2510 = vpack.c.b16 %v2448, %v2447
    %v2511 = vpack.c.b16 %v2450, %v2449
    %v2512 = vpack.c.b16 %v2452, %v2451
    %v2513 = vpack.c.b16 %v2454, %v2453
    %v2514 = vpack.c.b16 %v2456, %v2455
    %v2515 = vpack.c.b16 %v2458, %v2457
    %v2516 = vpack.c.b16 %v2460, %v2459
    %v2517 = vpack.c.b16 %v2462, %v2461
    %v2518 = vpack.c.b16 %v2464, %v2463
    %v2519 = vpack.c.b16 %v2466, %v2465
    %v2520 = vpack.c.b16 %v2468, %v2467
    %v2521 = vpack.c.b16 %v2470, %v2469
    %v2522 = vpack.c.b16 %v2472, %v2471
    %v2523 = vpack.c.b16 %v2474, %v2473
    %v2524 = vpack.c.b16 %v2476, %v2475
    %v2525 = vpack.c.b16 %v2478, %v2477
    %v2526 = vpack.c.b16 %v2480, %v2479
    %v2527 = vpack.c.b16 %v2482, %v2481
    %v2528 = vpack.c.b16 %v2484, %v2483
    %v2529 = vpack.c.b16 %v2486, %v2485
    %v2530 = vpack.c.b16 %v2488, %v2487
    %v2531 = vpack.c.b16 %v2490, %v2489
    %v2532 = vpack.c.b16 %v2492, %v2491
    %v2533 = vpack.c.b16 %v2494, %v2493
    %v2534 = vpack.c.b16 %v2496, %v2495
    %v2535 = vpack.c.b16 %v2498, %v2497
    %v2536 = vpack.c.b16 %v2500, %v2499
    %v2537 = vpack.c.b16 %v2502, %v2501
    %v2538 = vpack.c.b16 %v2504, %v2503
    %v2539 = vpack.c.b16 %v2506, %v2505
    %v2540 = vpack.c.b16 %v2508, %v2507
    %2573 = vmatprep.subr.bf16.mxu0 0
    %2574 = vmatpush1.bf16.msra.mxu0 %v2509
    %2575 = vmatprep.subr.bf16.mxu0 0
    %2576 = vmatpush1.bf16.msra.mxu0 %v2510
    %2577 = vmatprep.subr.bf16.mxu0 0
    %2578 = vmatpush1.bf16.msra.mxu0 %v2511
    %2579 = vmatprep.subr.bf16.mxu0 0
    %2580 = vmatpush1.bf16.msra.mxu0 %v2512
    %2581 = vmatprep.subr.bf16.mxu0 0
    %2582 = vmatpush1.bf16.msra.mxu0 %v2513
    %2583 = vmatprep.subr.bf16.mxu0 0
    %2584 = vmatpush1.bf16.msra.mxu0 %v2514
    %2585 = vmatprep.subr.bf16.mxu0 0
    %2586 = vmatpush1.bf16.msra.mxu0 %v2515
    %2587 = vmatprep.subr.bf16.mxu0 0
    %2588 = vmatpush1.bf16.msra.mxu0 %v2516
    %2589 = vmatprep.subr.bf16.mxu0 0
    %2590 = vmatpush1.bf16.msra.mxu0 %v2517
    %2591 = vmatprep.subr.bf16.mxu0 0
    %2592 = vmatpush1.bf16.msra.mxu0 %v2518
    %2593 = vmatprep.subr.bf16.mxu0 0
    %2594 = vmatpush1.bf16.msra.mxu0 %v2519
    %2595 = vmatprep.subr.bf16.mxu0 0
    %2596 = vmatpush1.bf16.msra.mxu0 %v2520
    %2597 = vmatprep.subr.bf16.mxu0 0
    %2598 = vmatpush1.bf16.msra.mxu0 %v2521
    %2599 = vmatprep.subr.bf16.mxu0 0
    %2600 = vmatpush1.bf16.msra.mxu0 %v2522
    %2601 = vmatprep.subr.bf16.mxu0 0
    %2602 = vmatpush1.bf16.msra.mxu0 %v2523
    %2603 = vmatprep.subr.bf16.mxu0 0
    %2604 = vmatpush1.bf16.msra.mxu0 %v2524
    %2605 = vmatprep.mubr.bf16.mxu0 %v2307
    %2606 = vmatmul.mubr.bf16.gmra.mrb[0].mxu0 %v2306
    %v2607 = vpop.f32.mrb[0].mxu0
    %v2608 = vadd.f32 %v2379, %v2607
    %v2609 = vpop.f32.mrb[0].mxu0
    %v2610 = vpop.f32.mrb[0].mxu0
    %v2611 = vpop.f32.mrb[0].mxu0
    %2612 = vdwg.mxu0
    %2613 = vmatprep.subr.bf16.mxu0 0
    %2614 = vmatpush1.bf16.msra.mxu0 %v2525
    %2615 = vmatprep.subr.bf16.mxu0 0
    %2616 = vmatpush1.bf16.msra.mxu0 %v2526
    %2617 = vmatprep.subr.bf16.mxu0 0
    %2618 = vmatpush1.bf16.msra.mxu0 %v2527
    %2619 = vmatprep.subr.bf16.mxu0 0
    %2620 = vmatpush1.bf16.msra.mxu0 %v2528
    %2621 = vmatprep.subr.bf16.mxu0 0
    %2622 = vmatpush1.bf16.msra.mxu0 %v2529
    %2623 = vmatprep.subr.bf16.mxu0 0
    %2624 = vmatpush1.bf16.msra.mxu0 %v2530
    %2625 = vmatprep.subr.bf16.mxu0 0
    %2626 = vmatpush1.bf16.msra.mxu0 %v2531
    %2627 = vmatprep.subr.bf16.mxu0 0
    %2628 = vmatpush1.bf16.msra.mxu0 %v2532
    %2629 = vmatprep.subr.bf16.mxu0 0
    %2630 = vmatpush1.bf16.msra.mxu0 %v2533
    %2631 = vmatprep.subr.bf16.mxu0 0
    %2632 = vmatpush1.bf16.msra.mxu0 %v2534
    %2633 = vmatprep.subr.bf16.mxu0 0
    %2634 = vmatpush1.bf16.msra.mxu0 %v2535
    %2635 = vmatprep.subr.bf16.mxu0 0
    %2636 = vmatpush1.bf16.msra.mxu0 %v2536
    %2637 = vmatprep.subr.bf16.mxu0 0
    %2638 = vmatpush1.bf16.msra.mxu0 %v2537
    %2639 = vmatprep.subr.bf16.mxu0 0
    %2640 = vmatpush1.bf16.msra.mxu0 %v2538
    %2641 = vmatprep.subr.bf16.mxu0 0
    %2642 = vmatpush1.bf16.msra.mxu0 %v2539
    %2643 = vmatprep.subr.bf16.mxu0 0
    %2644 = vmatpush1.bf16.msra.mxu0 %v2540
    %2645 = vmatprep.mubr.bf16.mxu0 %v2309
    %2646 = vmatmul.mubr.bf16.gmra.mrb[0].mxu0 %v2308
    %v2647 = vpop.f32.mrb[0].mxu0
    %v2648 = vadd.f32 %v2608, %v2647
    %v2649 = vpop.f32.mrb[0].mxu0
    %v2650 = vpop.f32.mrb[0].mxu0
    %v2651 = vpop.f32.mrb[0].mxu0
    %2652 = vdwg.mxu0
    %v2653 = vtanh.pop %v2648
    %2654 = vst [vmem:[#allocation11] sm:$0xff] %v2653
    // Predicated region
    $region50: #{actor_forward.1} parent=1 // pred_check
      _
    $region51: #{actor_forward.1} parent=1 // pred_check_branch
      %2656 = sbr.rel (0) target = $region53
    $region52: #{actor_forward.1} parent=1 // pred_region
      %s2658 = ssub.s32 128, 128
      %2659 = vsyncadd [#allocation4], %s2658
      %s2661 = sshll.u32 [#allocation11], 4
      %s2662 = int_to_ptr.vmem [resolvable:$true] %s2661
      %2664 = dma.vmem_to_hbm [thread:$0]  %s2662, 128, %s7, [#allocation4]
    $region53: #{actor_forward.1} parent=1 // pred_fallthru
      _
    // Predicated region
    $region54: #{actor_forward.1} parent=1 // pred_check
      _
    $region55: #{actor_forward.1} parent=1 // pred_check_branch
      %2666 = sbr.rel (0) target = $region57
    $region56: #{actor_forward.1} parent=1 // pred_region
      %2667 = dma.done [#allocation4], 128
    $region57: #{actor_forward.1} parent=1 // pred_fallthru
      _
    %2668 = vsyncpa [#allocation3], 1
    %2669 = vsyncpa [#allocation6], 1
    %2670 = vsyncpa [#allocation9], 1
    %2671 = vsyncpa [#allocation4], 1

</llo_original>
